<compile_context>
chip_gen: v6e
topology: v6e:2x2x1
jax: 0.10.0
libtpu: 0.0.40
codegen_flags: <defaults>
</compile_context>

<pallas_src>
import functools

import jax
import jax.numpy as jnp
from jax import lax
from jax.experimental import pallas as pl
from jax.experimental.pallas import tpu as pltpu

# Derivative filter from ImageGradients.__init__ (deterministic constants).
_F = tuple(c / 8418.0 for c in (-112.0, -913.0, -2047.0, 0.0, 2047.0, 913.0, 112.0))
_TAPS = tuple((k, _F[k]) for k in range(7) if _F[k] != 0.0)  # k == 3 weight is 0

_NQ = 7                 # 6 interaction-matrix columns + the error image e
_STATIC_BANDS_MAX = 8   # fully-static Python band loop up to this trip count


def _dvs_kernel(is_ref, ids_ref, zinv_ref, out_ref, *, h, w, border,
                px, py, u0, v0, zinv_cropped, band, n_bands):
    hc = h - 2 * border
    wc = w - 2 * border
    nq_b = _NQ * band
    inv_px = 1.0 / px
    inv_py = 1.0 / py

    if band & (band - 1) == 0:                      # power-of-2 band: mask/shift
        shift = band.bit_length() - 1
        _mod = lambda x: x & (band - 1)
        _div = lambda x: x >> shift
    else:                                           # tiny-frame fallback
        _mod = lambda x: x % band
        _div = lambda x: x // band

    # Coordinates regenerated in-kernel (no resident HBM planes):
    # xs varies along lanes and is band-invariant; ys needs the band row offset.
    lane = lax.broadcasted_iota(jnp.int32, (band, wc), 1).astype(jnp.float32)
    xs = (lane + (border - u0)) * inv_px                          # (band, wc)
    sub_f = lax.broadcasted_iota(jnp.int32, (band, wc), 0).astype(jnp.float32)
    sub_stack = _mod(lax.broadcasted_iota(jnp.int32, (nq_b, wc), 0))

    def band_step(b, acc):
        # Clamp the band start so a partial last band re-reads rows of the
        # previous band (kept in-bounds); re-read rows are masked out of S.
        static = isinstance(b, int)
        if static:
            r0 = min(b * band, hc - band)
            r0f = float(r0)
        else:
            r0 = jnp.minimum(b * band, hc - band)
            r0f = r0.astype(jnp.float32)
        a0 = border + r0                              # absolute band start row

        # --- ImageGradients on this band (zero center tap skipped) ----------
        k0, f0 = _TAPS[0]
        c0 = border - 3 + k0
        idx = f0 * ids_ref[0, pl.ds(a0, band), c0:c0 + wc].astype(jnp.float32)
        idy = f0 * ids_ref[0, pl.ds(a0 - 3 + k0, band),
                           border:border + wc].astype(jnp.float32)
        for k, fk in _TAPS[1:]:
            c = border - 3 + k
            idx = idx + fk * ids_ref[0, pl.ds(a0, band), c:c + wc].astype(jnp.float32)
            idy = idy + fk * ids_ref[0, pl.ds(a0 - 3 + k, band),
                                     border:border + wc].astype(jnp.float32)

        # --- cropped center windows of this band -----------------------------
        ids_c = ids_ref[0, pl.ds(a0, band), border:border + wc].astype(jnp.float32)
        is_c = is_ref[0, pl.ds(a0, band), border:border + wc].astype(jnp.float32)
        if zinv_cropped:
            zinv = zinv_ref[0, pl.ds(r0, band), :].astype(jnp.float32)
        else:
            zinv = zinv_ref[0, pl.ds(a0, band), border:border + wc].astype(jnp.float32)

        ys = (sub_f + (r0f + border - v0)) * inv_py
        xsys = xs * ys

        ix = idx * px
        iy = idy * py
        e = is_c - ids_c                              # DVSError

        # DVSInteractionMatrix columns + error, stacked quantity-major into S.
        s = jnp.concatenate([
            ix * zinv,
            iy * zinv,
            -(xs * ix + ys * iy) * zinv,
            -ix * xsys - (1.0 + ys * ys) * iy,
            (1.0 + xs * xs) * ix + iy * xsys,
            iy * xs - ix * ys,
            e,
        ], axis=0)                                    # (7*band, wc), in vregs

        lower = b * band
        if not (static and r0 == lower):              # only clamped bands mask
            s = jnp.where((sub_stack + r0) >= lower, s, 0.0)

        # TODO(synk): bf16 operands here would ~3x MXU throughput but eat ~3
        #             decimal digits of the 1e-3 Hsd/g budget; kept f32.
        return acc + lax.dot_general(s, s, (((1,), (1,)), ((), ())),
                                     preferred_element_type=jnp.float32)

    acc0 = jnp.zeros((nq_b, nq_b), jnp.float32)
    if n_bands <= _STATIC_BANDS_MAX:
        acc = acc0
        for b in range(n_bands):                      # fully static slices
            acc = band_step(b, acc)
    else:
        acc = lax.fori_loop(0, n_bands, band_step, acc0, unroll=2)

    # Block-trace extraction: Gram[i, j] = sum_r acc[band*i + r, band*j + r].
    row = lax.broadcasted_iota(jnp.int32, (nq_b, nq_b), 0)
    col = lax.broadcasted_iota(jnp.int32, (nq_b, nq_b), 1)
    diag = jnp.where(_mod(row) == _mod(col), acc, 0.0)
    qi = lax.broadcasted_iota(jnp.int32, (_NQ, nq_b), 0)
    pq = _div(lax.broadcasted_iota(jnp.int32, (_NQ, nq_b), 1))
    sel = (qi == pq).astype(jnp.float32)                            # (7, nq_b)
    t = lax.dot_general(diag, sel, (((1,), (1,)), ((), ())),
                        preferred_element_type=jnp.float32)         # (nq_b, 7)
    gram = lax.dot_general(sel, t, (((1,), (0,)), ((), ())),
                           preferred_element_type=jnp.float32)      # (7, 7)

    out_ref[0] = gram                                 # single store per step


def dvs_normal_equations(Is, Ids, Zinv, *, px, py, u0, v0, border):
    """Pallas call producing Hsd (B,6,6) and g = Lsd^T e (B,6)."""
    B, h, w = Is.shape
    hc, wc = h - 2 * border, w - 2 * border
    band = 16 if hc >= 16 else (8 if hc >= 8 else hc)
    n_bands = -(-hc // band)

    zinv_cropped = (Zinv.ndim == 2)
    if zinv_cropped:
        # Module's pre-flattened branch: free reshape, no HBM pad/crop pass.
        zin = Zinv.reshape(B, hc, wc)
        zinv_spec = pl.BlockSpec((1, hc, wc), lambda b: (b, 0, 0))
    else:
        zin = Zinv
        zinv_spec = pl.BlockSpec((1, h, w), lambda b: (b, 0, 0))

    kernel = functools.partial(
        _dvs_kernel, h=h, w=w, border=border, px=float(px), py=float(py),
        u0=float(u0), v0=float(v0), zinv_cropped=zinv_cropped,
        band=band, n_bands=n_bands)

    # VMEM budget: double-buffered input planes + headroom for in-kernel work.
    in_bytes = (Is.dtype.itemsize * h * w + Ids.dtype.itemsize * h * w
                + zin.dtype.itemsize * zin.shape[1] * zin.shape[2])
    vmem_limit = int(min(2 * in_bytes + (16 << 20), 96 << 20))

    gram = pl.pallas_call(
        kernel,
        out_shape=jax.ShapeDtypeStruct((B, _NQ, _NQ), jnp.float32),
        grid_spec=pltpu.PrefetchScalarGridSpec(
            num_scalar_prefetch=0,
            grid=(B,),
            in_specs=[
                pl.BlockSpec((1, h, w), lambda b: (b, 0, 0)),   # Is (source dtype)
                pl.BlockSpec((1, h, w), lambda b: (b, 0, 0)),   # Ids (source dtype)
                zinv_spec,                                      # Zinv
            ],
            out_specs=pl.BlockSpec((1, _NQ, _NQ), lambda b: (b, 0, 0))),
        compiler_params=pltpu.CompilerParams(
            dimension_semantics=("parallel",),
            vmem_limit_bytes=vmem_limit),
    )(Is, Ids, zin)

    hsd = gram[:, :6, :6]
    g = gram[:, :6, 6]
    return hsd, g


def dvs_forward(Is, Ids, Zinv, mu, *, px, py, u0, v0, border):
    """Full DVS.forward: returns vc of shape (B, 6)."""
    hsd, g = dvs_normal_equations(Is, Ids, Zinv,
                                  px=px, py=py, u0=u0, v0=v0, border=border)
    diag = jnp.diagonal(hsd, axis1=-2, axis2=-1)            # (B, 6)
    eye6 = jnp.eye(6, dtype=jnp.float32)
    diag_hsd = eye6[None] * diag[:, None, :]                # (B, 6, 6)
    # TODO(synk): 6x6 batched Levenberg-Marquardt solve stays in plain JAX.
    H = jnp.linalg.inv(mu.reshape(-1, 1, 1) * diag_hsd + hsd)
    vc = -jnp.einsum('bij,bj->bi', H, g)
    return vc


def _reference_hsd_g(Is, Ids, Zinv3, *, px, py, u0, v0, border):
    """Plain-JAX transcription of the PyTorch math (for validation)."""
    B, h, w = Is.shape
    hc, wc = h - 2 * border, w - 2 * border
    f = jnp.asarray(_F, jnp.float32)
    idx = jnp.zeros((B, hc, wc), jnp.float32)
    idy = jnp.zeros((B, hc, wc), jnp.float32)
    for k in range(7):
        off = border - 3 + k
        idx = idx + f[k] * Ids[:, border:border + hc, off:off + wc]
        idy = idy + f[k] * Ids[:, off:off + hc, border:border + wc]
    us = jnp.arange(border, w - border, dtype=jnp.float32)
    vs = jnp.arange(border, h - border, dtype=jnp.float32)
    xs = jnp.tile((us - u0) / px, hc)
    ys = jnp.repeat((vs - v0) / py, wc)
    xsys = xs * ys
    ix = idx.reshape(B, -1) * px
    iy = idy.reshape(B, -1) * py
    z = Zinv3[:, border:-border, border:-border].reshape(B, -1)
    cols = [ix * z, iy * z, -(xs * ix + ys * iy) * z,
            -ix * xsys - (1.0 + ys ** 2) * iy,
            (1.0 + xs ** 2) * ix + iy * xsys,
            iy * xs - ix * ys]
    Ls = jnp.stack(cols, axis=-1)                           # (B, N, 6)
    e = (Is[:, border:-border, border:-border]
         - Ids[:, border:-border, border:-border]).reshape(B, -1)
    hsd = jnp.einsum('bpi,bpj->bij', Ls, Ls)
    g = jnp.einsum('bpi,bp->bi', Ls, e)
    return hsd, g


if __name__ == "__main__":
    # Small but multi-band shape: hc = wc = 24 -> BAND=16, 2 bands, the second
    # one clamped + masked (exercises the partial-band path).
    B, h, w, border = 2, 32, 32, 4          # border > 3 as required
    px = py = 300.0
    u0, v0 = w / 2.0, h / 2.0

    key = jax.random.PRNGKey(0)
    k1, k2, k3, k4 = jax.random.split(key, 4)
    Is = jax.random.normal(k1, (B, h, w), jnp.float32)
    Ids = jax.random.normal(k2, (B, h, w), jnp.float32)
    Zinv3 = jax.random.uniform(k3, (B, h, w), jnp.float32, minval=0.5, maxval=1.5)
    mu = jax.random.uniform(k4, (B,), jnp.float32, minval=0.2, maxval=1.0)

    hsd_ref, g_ref = _reference_hsd_g(Is, Ids, Zinv3, px=px, py=py, u0=u0,
                                      v0=v0, border=border)

    # Path 1: full (B, h, w) Zinv.
    hsd1, g1 = dvs_normal_equations(Is, Ids, Zinv3, px=px, py=py, u0=u0, v0=v0,
                                    border=border)
    # Path 2: pre-cropped, pre-flattened (B, hc*wc) Zinv (module's other branch).
    Zinv2 = Zinv3[:, border:-border, border:-border].reshape(B, -1)
    hsd2, g2 = dvs_normal_equations(Is, Ids, Zinv2, px=px, py=py, u0=u0, v0=v0,
                                    border=border)

    vc = dvs_forward(Is, Ids, Zinv3, mu, px=px, py=py, u0=u0, v0=v0,
                     border=border)
    jax.block_until_ready((hsd1, g1, hsd2, g2, vc))

    def _rel(a, b):
        return float(jnp.max(jnp.abs(a - b)) / (jnp.max(jnp.abs(b)) + 1e-6))

    assert _rel(hsd1, hsd_ref) < 1e-3, f"Hsd mismatch (3D Zinv): {_rel(hsd1, hsd_ref)}"
    assert _rel(g1, g_ref) < 1e-3, f"g mismatch (3D Zinv): {_rel(g1, g_ref)}"
    assert _rel(hsd2, hsd_ref) < 1e-3, f"Hsd mismatch (2D Zinv): {_rel(hsd2, hsd_ref)}"
    assert _rel(g2, g_ref) < 1e-3, f"g mismatch (2D Zinv): {_rel(g2, g_ref)}"
    assert vc.shape == (B, 6)
    assert bool(jnp.all(jnp.isfinite(vc)))
    print("KERNEL_OK")
</pallas_src>

<mosaic_0001>
module attributes {stable_mosaic.version = 11 : i64} {
  func.func @_dvs_kernel(%arg0: i32, %arg1: memref<1x32x32xf32, #tpu.memory_space<vmem>>, %arg2: memref<1x32x32xf32, #tpu.memory_space<vmem>>, %arg3: memref<1x32x32xf32, #tpu.memory_space<vmem>>, %arg4: memref<1x7x7xf32, #tpu.memory_space<vmem>>) attributes {dimension_semantics = [#tpu.dimension_semantics<parallel>], iteration_bounds = array<i64: 2>, scalar_prefetch = 0 : i64, scratch_operands = 0 : i64, tpu.core_type = #tpu.core_type<tc>, window_params = [{transform_indices = @transform_0, window_bounds = array<i64: 1, 32, 32>}, {transform_indices = @transform_1, window_bounds = array<i64: 1, 32, 32>}, {transform_indices = @transform_2, window_bounds = array<i64: 1, 32, 32>}, {transform_indices = @transform_3, window_bounds = array<i64: 1, 7, 7>}]} {
    %0 = tpu.iota {dimensions = array<i32: 1>} : vector<16x24xi32>
    %1 = arith.sitofp %0 : vector<16x24xi32> to vector<16x24xf32>
    %cst = arith.constant -1.200000e+01 : f32
    %2 = vector.broadcast %cst : f32 to vector<16x24xf32>
    %3 = arith.addf %1, %2 : vector<16x24xf32>
    %cst_0 = arith.constant 0.00333333341 : f32
    %4 = vector.broadcast %cst_0 : f32 to vector<16x24xf32>
    %5 = arith.mulf %3, %4 : vector<16x24xf32>
    %6 = tpu.iota {dimensions = array<i32: 0>} : vector<16x24xi32>
    %7 = arith.sitofp %6 : vector<16x24xi32> to vector<16x24xf32>
    %8 = tpu.iota {dimensions = array<i32: 0>} : vector<112x24xi32>
    %c15_i32 = arith.constant 15 : i32
    %9 = vector.broadcast %c15_i32 : i32 to vector<112x24xi32>
    %10 = arith.andi %8, %9 : vector<112x24xi32>
    %cst_1 = arith.constant 0.000000e+00 : f32
    %11 = vector.broadcast %cst_1 : f32 to vector<112x112xf32>
    %c0 = arith.constant 0 : index
    %c4 = arith.constant 4 : index
    %c1 = arith.constant 1 : index
    %12 = vector.load %arg2[%c0, %c4, %c1] : memref<1x32x32xf32, #tpu.memory_space<vmem>>, vector<1x16x24xf32>
    %13 = vector.shape_cast %12 : vector<1x16x24xf32> to vector<16x24xf32>
    %cst_2 = arith.constant -0.0133048231 : f32
    %14 = vector.broadcast %cst_2 : f32 to vector<16x24xf32>
    %15 = arith.mulf %14, %13 : vector<16x24xf32>
    %c0_3 = arith.constant 0 : index
    %c1_4 = arith.constant 1 : index
    %c4_5 = arith.constant 4 : index
    %16 = vector.load %arg2[%c0_3, %c1_4, %c4_5] : memref<1x32x32xf32, #tpu.memory_space<vmem>>, vector<1x16x24xf32>
    %17 = vector.shape_cast %16 : vector<1x16x24xf32> to vector<16x24xf32>
    %cst_6 = arith.constant -0.0133048231 : f32
    %18 = vector.broadcast %cst_6 : f32 to vector<16x24xf32>
    %19 = arith.mulf %18, %17 : vector<16x24xf32>
    %c0_7 = arith.constant 0 : index
    %c4_8 = arith.constant 4 : index
    %c2 = arith.constant 2 : index
    %20 = vector.load %arg2[%c0_7, %c4_8, %c2] : memref<1x32x32xf32, #tpu.memory_space<vmem>>, vector<1x16x24xf32>
    %21 = vector.shape_cast %20 : vector<1x16x24xf32> to vector<16x24xf32>
    %cst_9 = arith.constant -0.108458064 : f32
    %22 = vector.broadcast %cst_9 : f32 to vector<16x24xf32>
    %23 = arith.mulf %22, %21 : vector<16x24xf32>
    %24 = arith.addf %15, %23 : vector<16x24xf32>
    %c0_10 = arith.constant 0 : index
    %c2_11 = arith.constant 2 : index
    %c4_12 = arith.constant 4 : index
    %25 = vector.load %arg2[%c0_10, %c2_11, %c4_12] : memref<1x32x32xf32, #tpu.memory_space<vmem>>, vector<1x16x24xf32>
    %26 = vector.shape_cast %25 : vector<1x16x24xf32> to vector<16x24xf32>
    %cst_13 = arith.constant -0.108458064 : f32
    %27 = vector.broadcast %cst_13 : f32 to vector<16x24xf32>
    %28 = arith.mulf %27, %26 : vector<16x24xf32>
    %29 = arith.addf %19, %28 : vector<16x24xf32>
    %c0_14 = arith.constant 0 : index
    %c4_15 = arith.constant 4 : index
    %c3 = arith.constant 3 : index
    %30 = vector.load %arg2[%c0_14, %c4_15, %c3] : memref<1x32x32xf32, #tpu.memory_space<vmem>>, vector<1x16x24xf32>
    %31 = vector.shape_cast %30 : vector<1x16x24xf32> to vector<16x24xf32>
    %cst_16 = arith.constant -0.243169397 : f32
    %32 = vector.broadcast %cst_16 : f32 to vector<16x24xf32>
    %33 = arith.mulf %32, %31 : vector<16x24xf32>
    %34 = arith.addf %24, %33 : vector<16x24xf32>
    %c0_17 = arith.constant 0 : index
    %c3_18 = arith.constant 3 : index
    %c4_19 = arith.constant 4 : index
    %35 = vector.load %arg2[%c0_17, %c3_18, %c4_19] : memref<1x32x32xf32, #tpu.memory_space<vmem>>, vector<1x16x24xf32>
    %36 = vector.shape_cast %35 : vector<1x16x24xf32> to vector<16x24xf32>
    %cst_20 = arith.constant -0.243169397 : f32
    %37 = vector.broadcast %cst_20 : f32 to vector<16x24xf32>
    %38 = arith.mulf %37, %36 : vector<16x24xf32>
    %39 = arith.addf %29, %38 : vector<16x24xf32>
    %c0_21 = arith.constant 0 : index
    %c4_22 = arith.constant 4 : index
    %c5 = arith.constant 5 : index
    %40 = vector.load %arg2[%c0_21, %c4_22, %c5] : memref<1x32x32xf32, #tpu.memory_space<vmem>>, vector<1x16x24xf32>
    %41 = vector.shape_cast %40 : vector<1x16x24xf32> to vector<16x24xf32>
    %cst_23 = arith.constant 0.243169397 : f32
    %42 = vector.broadcast %cst_23 : f32 to vector<16x24xf32>
    %43 = arith.mulf %42, %41 : vector<16x24xf32>
    %44 = arith.addf %34, %43 : vector<16x24xf32>
    %c0_24 = arith.constant 0 : index
    %c5_25 = arith.constant 5 : index
    %c4_26 = arith.constant 4 : index
    %45 = vector.load %arg2[%c0_24, %c5_25, %c4_26] : memref<1x32x32xf32, #tpu.memory_space<vmem>>, vector<1x16x24xf32>
    %46 = vector.shape_cast %45 : vector<1x16x24xf32> to vector<16x24xf32>
    %cst_27 = arith.constant 0.243169397 : f32
    %47 = vector.broadcast %cst_27 : f32 to vector<16x24xf32>
    %48 = arith.mulf %47, %46 : vector<16x24xf32>
    %49 = arith.addf %39, %48 : vector<16x24xf32>
    %c0_28 = arith.constant 0 : index
    %c4_29 = arith.constant 4 : index
    %c6 = arith.constant 6 : index
    %50 = vector.load %arg2[%c0_28, %c4_29, %c6] : memref<1x32x32xf32, #tpu.memory_space<vmem>>, vector<1x16x24xf32>
    %51 = vector.shape_cast %50 : vector<1x16x24xf32> to vector<16x24xf32>
    %cst_30 = arith.constant 0.108458064 : f32
    %52 = vector.broadcast %cst_30 : f32 to vector<16x24xf32>
    %53 = arith.mulf %52, %51 : vector<16x24xf32>
    %54 = arith.addf %44, %53 : vector<16x24xf32>
    %c0_31 = arith.constant 0 : index
    %c6_32 = arith.constant 6 : index
    %c4_33 = arith.constant 4 : index
    %55 = vector.load %arg2[%c0_31, %c6_32, %c4_33] : memref<1x32x32xf32, #tpu.memory_space<vmem>>, vector<1x16x24xf32>
    %56 = vector.shape_cast %55 : vector<1x16x24xf32> to vector<16x24xf32>
    %cst_34 = arith.constant 0.108458064 : f32
    %57 = vector.broadcast %cst_34 : f32 to vector<16x24xf32>
    %58 = arith.mulf %57, %56 : vector<16x24xf32>
    %59 = arith.addf %49, %58 : vector<16x24xf32>
    %c0_35 = arith.constant 0 : index
    %c4_36 = arith.constant 4 : index
    %c7 = arith.constant 7 : index
    %60 = vector.load %arg2[%c0_35, %c4_36, %c7] : memref<1x32x32xf32, #tpu.memory_space<vmem>>, vector<1x16x24xf32>
    %61 = vector.shape_cast %60 : vector<1x16x24xf32> to vector<16x24xf32>
    %cst_37 = arith.constant 0.0133048231 : f32
    %62 = vector.broadcast %cst_37 : f32 to vector<16x24xf32>
    %63 = arith.mulf %62, %61 : vector<16x24xf32>
    %64 = arith.addf %54, %63 : vector<16x24xf32>
    %c0_38 = arith.constant 0 : index
    %c7_39 = arith.constant 7 : index
    %c4_40 = arith.constant 4 : index
    %65 = vector.load %arg2[%c0_38, %c7_39, %c4_40] : memref<1x32x32xf32, #tpu.memory_space<vmem>>, vector<1x16x24xf32>
    %66 = vector.shape_cast %65 : vector<1x16x24xf32> to vector<16x24xf32>
    %cst_41 = arith.constant 0.0133048231 : f32
    %67 = vector.broadcast %cst_41 : f32 to vector<16x24xf32>
    %68 = arith.mulf %67, %66 : vector<16x24xf32>
    %69 = arith.addf %59, %68 : vector<16x24xf32>
    %c0_42 = arith.constant 0 : index
    %c4_43 = arith.constant 4 : index
    %c4_44 = arith.constant 4 : index
    %70 = vector.load %arg2[%c0_42, %c4_43, %c4_44] : memref<1x32x32xf32, #tpu.memory_space<vmem>>, vector<1x16x24xf32>
    %71 = vector.shape_cast %70 : vector<1x16x24xf32> to vector<16x24xf32>
    %c0_45 = arith.constant 0 : index
    %c4_46 = arith.constant 4 : index
    %c4_47 = arith.constant 4 : index
    %72 = vector.load %arg1[%c0_45, %c4_46, %c4_47] : memref<1x32x32xf32, #tpu.memory_space<vmem>>, vector<1x16x24xf32>
    %73 = vector.shape_cast %72 : vector<1x16x24xf32> to vector<16x24xf32>
    %c0_48 = arith.constant 0 : index
    %c4_49 = arith.constant 4 : index
    %c4_50 = arith.constant 4 : index
    %74 = vector.load %arg3[%c0_48, %c4_49, %c4_50] : memref<1x32x32xf32, #tpu.memory_space<vmem>>, vector<1x16x24xf32>
    %75 = vector.shape_cast %74 : vector<1x16x24xf32> to vector<16x24xf32>
    %cst_51 = arith.constant -1.200000e+01 : f32
    %76 = vector.broadcast %cst_51 : f32 to vector<16x24xf32>
    %77 = arith.addf %7, %76 : vector<16x24xf32>
    %cst_52 = arith.constant 0.00333333341 : f32
    %78 = vector.broadcast %cst_52 : f32 to vector<16x24xf32>
    %79 = arith.mulf %77, %78 : vector<16x24xf32>
    %80 = arith.mulf %5, %79 : vector<16x24xf32>
    %cst_53 = arith.constant 3.000000e+02 : f32
    %81 = vector.broadcast %cst_53 : f32 to vector<16x24xf32>
    %82 = arith.mulf %64, %81 : vector<16x24xf32>
    %cst_54 = arith.constant 3.000000e+02 : f32
    %83 = vector.broadcast %cst_54 : f32 to vector<16x24xf32>
    %84 = arith.mulf %69, %83 : vector<16x24xf32>
    %85 = arith.subf %73, %71 : vector<16x24xf32>
    %86 = arith.mulf %82, %75 : vector<16x24xf32>
    %87 = arith.mulf %84, %75 : vector<16x24xf32>
    %88 = arith.mulf %5, %82 : vector<16x24xf32>
    %89 = arith.mulf %79, %84 : vector<16x24xf32>
    %90 = arith.addf %88, %89 : vector<16x24xf32>
    %cst_55 = arith.constant 0.000000e+00 : f32
    %91 = vector.broadcast %cst_55 : f32 to vector<16x24xf32>
    %92 = arith.subf %91, %90 : vector<16x24xf32>
    %93 = arith.mulf %92, %75 : vector<16x24xf32>
    %cst_56 = arith.constant 0.000000e+00 : f32
    %94 = vector.broadcast %cst_56 : f32 to vector<16x24xf32>
    %95 = arith.subf %94, %82 : vector<16x24xf32>
    %96 = arith.mulf %95, %80 : vector<16x24xf32>
    %97 = arith.mulf %79, %79 : vector<16x24xf32>
    %cst_57 = arith.constant 1.000000e+00 : f32
    %98 = vector.broadcast %cst_57 : f32 to vector<16x24xf32>
    %99 = arith.addf %98, %97 : vector<16x24xf32>
    %100 = arith.mulf %99, %84 : vector<16x24xf32>
    %101 = arith.subf %96, %100 : vector<16x24xf32>
    %102 = arith.mulf %5, %5 : vector<16x24xf32>
    %cst_58 = arith.constant 1.000000e+00 : f32
    %103 = vector.broadcast %cst_58 : f32 to vector<16x24xf32>
    %104 = arith.addf %103, %102 : vector<16x24xf32>
    %105 = arith.mulf %104, %82 : vector<16x24xf32>
    %106 = arith.mulf %84, %80 : vector<16x24xf32>
    %107 = arith.addf %105, %106 : vector<16x24xf32>
    %108 = arith.mulf %84, %5 : vector<16x24xf32>
    %109 = arith.mulf %82, %79 : vector<16x24xf32>
    %110 = arith.subf %108, %109 : vector<16x24xf32>
    %111 = tpu.concatenate %86, %87, %93, %101, %107, %110, %85 in 0 : vector<16x24xf32>, vector<16x24xf32>, vector<16x24xf32>, vector<16x24xf32>, vector<16x24xf32>, vector<16x24xf32>, vector<16x24xf32> -> vector<112x24xf32>
    %cst_59 = arith.constant dense<0.000000e+00> : vector<112x112xf32>
    %112 = tpu.matmul %111, %111, %cst_59 {dimension_numbers = #tpu.dot_dimension_numbers<[1], [1], [0], [0], [0, 0, 1, 0], [], []>} : vector<112x24xf32>, vector<112x24xf32>, vector<112x112xf32> -> vector<112x112xf32>
    %113 = arith.addf %11, %112 : vector<112x112xf32>
    %c0_60 = arith.constant 0 : index
    %c12 = arith.constant 12 : index
    %c1_61 = arith.constant 1 : index
    %114 = vector.load %arg2[%c0_60, %c12, %c1_61] : memref<1x32x32xf32, #tpu.memory_space<vmem>>, vector<1x16x24xf32>
    %115 = vector.shape_cast %114 : vector<1x16x24xf32> to vector<16x24xf32>
    %cst_62 = arith.constant -0.0133048231 : f32
    %116 = vector.broadcast %cst_62 : f32 to vector<16x24xf32>
    %117 = arith.mulf %116, %115 : vector<16x24xf32>
    %c0_63 = arith.constant 0 : index
    %c9 = arith.constant 9 : index
    %c4_64 = arith.constant 4 : index
    %118 = vector.load %arg2[%c0_63, %c9, %c4_64] : memref<1x32x32xf32, #tpu.memory_space<vmem>>, vector<1x16x24xf32>
    %119 = vector.shape_cast %118 : vector<1x16x24xf32> to vector<16x24xf32>
    %cst_65 = arith.constant -0.0133048231 : f32
    %120 = vector.broadcast %cst_65 : f32 to vector<16x24xf32>
    %121 = arith.mulf %120, %119 : vector<16x24xf32>
    %c0_66 = arith.constant 0 : index
    %c12_67 = arith.constant 12 : index
    %c2_68 = arith.constant 2 : index
    %122 = vector.load %arg2[%c0_66, %c12_67, %c2_68] : memref<1x32x32xf32, #tpu.memory_space<vmem>>, vector<1x16x24xf32>
    %123 = vector.shape_cast %122 : vector<1x16x24xf32> to vector<16x24xf32>
    %cst_69 = arith.constant -0.108458064 : f32
    %124 = vector.broadcast %cst_69 : f32 to vector<16x24xf32>
    %125 = arith.mulf %124, %123 : vector<16x24xf32>
    %126 = arith.addf %117, %125 : vector<16x24xf32>
    %c0_70 = arith.constant 0 : index
    %c10 = arith.constant 10 : index
    %c4_71 = arith.constant 4 : index
    %127 = vector.load %arg2[%c0_70, %c10, %c4_71] : memref<1x32x32xf32, #tpu.memory_space<vmem>>, vector<1x16x24xf32>
    %128 = vector.shape_cast %127 : vector<1x16x24xf32> to vector<16x24xf32>
    %cst_72 = arith.constant -0.108458064 : f32
    %129 = vector.broadcast %cst_72 : f32 to vector<16x24xf32>
    %130 = arith.mulf %129, %128 : vector<16x24xf32>
    %131 = arith.addf %121, %130 : vector<16x24xf32>
    %c0_73 = arith.constant 0 : index
    %c12_74 = arith.constant 12 : index
    %c3_75 = arith.constant 3 : index
    %132 = vector.load %arg2[%c0_73, %c12_74, %c3_75] : memref<1x32x32xf32, #tpu.memory_space<vmem>>, vector<1x16x24xf32>
    %133 = vector.shape_cast %132 : vector<1x16x24xf32> to vector<16x24xf32>
    %cst_76 = arith.constant -0.243169397 : f32
    %134 = vector.broadcast %cst_76 : f32 to vector<16x24xf32>
    %135 = arith.mulf %134, %133 : vector<16x24xf32>
    %136 = arith.addf %126, %135 : vector<16x24xf32>
    %c0_77 = arith.constant 0 : index
    %c11 = arith.constant 11 : index
    %c4_78 = arith.constant 4 : index
    %137 = vector.load %arg2[%c0_77, %c11, %c4_78] : memref<1x32x32xf32, #tpu.memory_space<vmem>>, vector<1x16x24xf32>
    %138 = vector.shape_cast %137 : vector<1x16x24xf32> to vector<16x24xf32>
    %cst_79 = arith.constant -0.243169397 : f32
    %139 = vector.broadcast %cst_79 : f32 to vector<16x24xf32>
    %140 = arith.mulf %139, %138 : vector<16x24xf32>
    %141 = arith.addf %131, %140 : vector<16x24xf32>
    %c0_80 = arith.constant 0 : index
    %c12_81 = arith.constant 12 : index
    %c5_82 = arith.constant 5 : index
    %142 = vector.load %arg2[%c0_80, %c12_81, %c5_82] : memref<1x32x32xf32, #tpu.memory_space<vmem>>, vector<1x16x24xf32>
    %143 = vector.shape_cast %142 : vector<1x16x24xf32> to vector<16x24xf32>
    %cst_83 = arith.constant 0.243169397 : f32
    %144 = vector.broadcast %cst_83 : f32 to vector<16x24xf32>
    %145 = arith.mulf %144, %143 : vector<16x24xf32>
    %146 = arith.addf %136, %145 : vector<16x24xf32>
    %c0_84 = arith.constant 0 : index
    %c13 = arith.constant 13 : index
    %c4_85 = arith.constant 4 : index
    %147 = vector.load %arg2[%c0_84, %c13, %c4_85] : memref<1x32x32xf32, #tpu.memory_space<vmem>>, vector<1x16x24xf32>
    %148 = vector.shape_cast %147 : vector<1x16x24xf32> to vector<16x24xf32>
    %cst_86 = arith.constant 0.243169397 : f32
    %149 = vector.broadcast %cst_86 : f32 to vector<16x24xf32>
    %150 = arith.mulf %149, %148 : vector<16x24xf32>
    %151 = arith.addf %141, %150 : vector<16x24xf32>
    %c0_87 = arith.constant 0 : index
    %c12_88 = arith.constant 12 : index
    %c6_89 = arith.constant 6 : index
    %152 = vector.load %arg2[%c0_87, %c12_88, %c6_89] : memref<1x32x32xf32, #tpu.memory_space<vmem>>, vector<1x16x24xf32>
    %153 = vector.shape_cast %152 : vector<1x16x24xf32> to vector<16x24xf32>
    %cst_90 = arith.constant 0.108458064 : f32
    %154 = vector.broadcast %cst_90 : f32 to vector<16x24xf32>
    %155 = arith.mulf %154, %153 : vector<16x24xf32>
    %156 = arith.addf %146, %155 : vector<16x24xf32>
    %c0_91 = arith.constant 0 : index
    %c14 = arith.constant 14 : index
    %c4_92 = arith.constant 4 : index
    %157 = vector.load %arg2[%c0_91, %c14, %c4_92] : memref<1x32x32xf32, #tpu.memory_space<vmem>>, vector<1x16x24xf32>
    %158 = vector.shape_cast %157 : vector<1x16x24xf32> to vector<16x24xf32>
    %cst_93 = arith.constant 0.108458064 : f32
    %159 = vector.broadcast %cst_93 : f32 to vector<16x24xf32>
    %160 = arith.mulf %159, %158 : vector<16x24xf32>
    %161 = arith.addf %151, %160 : vector<16x24xf32>
    %c0_94 = arith.constant 0 : index
    %c12_95 = arith.constant 12 : index
    %c7_96 = arith.constant 7 : index
    %162 = vector.load %arg2[%c0_94, %c12_95, %c7_96] : memref<1x32x32xf32, #tpu.memory_space<vmem>>, vector<1x16x24xf32>
    %163 = vector.shape_cast %162 : vector<1x16x24xf32> to vector<16x24xf32>
    %cst_97 = arith.constant 0.0133048231 : f32
    %164 = vector.broadcast %cst_97 : f32 to vector<16x24xf32>
    %165 = arith.mulf %164, %163 : vector<16x24xf32>
    %166 = arith.addf %156, %165 : vector<16x24xf32>
    %c0_98 = arith.constant 0 : index
    %c15 = arith.constant 15 : index
    %c4_99 = arith.constant 4 : index
    %167 = vector.load %arg2[%c0_98, %c15, %c4_99] : memref<1x32x32xf32, #tpu.memory_space<vmem>>, vector<1x16x24xf32>
    %168 = vector.shape_cast %167 : vector<1x16x24xf32> to vector<16x24xf32>
    %cst_100 = arith.constant 0.0133048231 : f32
    %169 = vector.broadcast %cst_100 : f32 to vector<16x24xf32>
    %170 = arith.mulf %169, %168 : vector<16x24xf32>
    %171 = arith.addf %161, %170 : vector<16x24xf32>
    %c0_101 = arith.constant 0 : index
    %c12_102 = arith.constant 12 : index
    %c4_103 = arith.constant 4 : index
    %172 = vector.load %arg2[%c0_101, %c12_102, %c4_103] : memref<1x32x32xf32, #tpu.memory_space<vmem>>, vector<1x16x24xf32>
    %173 = vector.shape_cast %172 : vector<1x16x24xf32> to vector<16x24xf32>
    %c0_104 = arith.constant 0 : index
    %c12_105 = arith.constant 12 : index
    %c4_106 = arith.constant 4 : index
    %174 = vector.load %arg1[%c0_104, %c12_105, %c4_106] : memref<1x32x32xf32, #tpu.memory_space<vmem>>, vector<1x16x24xf32>
    %175 = vector.shape_cast %174 : vector<1x16x24xf32> to vector<16x24xf32>
    %c0_107 = arith.constant 0 : index
    %c12_108 = arith.constant 12 : index
    %c4_109 = arith.constant 4 : index
    %176 = vector.load %arg3[%c0_107, %c12_108, %c4_109] : memref<1x32x32xf32, #tpu.memory_space<vmem>>, vector<1x16x24xf32>
    %177 = vector.shape_cast %176 : vector<1x16x24xf32> to vector<16x24xf32>
    %cst_110 = arith.constant -4.000000e+00 : f32
    %178 = vector.broadcast %cst_110 : f32 to vector<16x24xf32>
    %179 = arith.addf %7, %178 : vector<16x24xf32>
    %cst_111 = arith.constant 0.00333333341 : f32
    %180 = vector.broadcast %cst_111 : f32 to vector<16x24xf32>
    %181 = arith.mulf %179, %180 : vector<16x24xf32>
    %182 = arith.mulf %5, %181 : vector<16x24xf32>
    %cst_112 = arith.constant 3.000000e+02 : f32
    %183 = vector.broadcast %cst_112 : f32 to vector<16x24xf32>
    %184 = arith.mulf %166, %183 : vector<16x24xf32>
    %cst_113 = arith.constant 3.000000e+02 : f32
    %185 = vector.broadcast %cst_113 : f32 to vector<16x24xf32>
    %186 = arith.mulf %171, %185 : vector<16x24xf32>
    %187 = arith.subf %175, %173 : vector<16x24xf32>
    %188 = arith.mulf %184, %177 : vector<16x24xf32>
    %189 = arith.mulf %186, %177 : vector<16x24xf32>
    %190 = arith.mulf %5, %184 : vector<16x24xf32>
    %191 = arith.mulf %181, %186 : vector<16x24xf32>
    %192 = arith.addf %190, %191 : vector<16x24xf32>
    %cst_114 = arith.constant 0.000000e+00 : f32
    %193 = vector.broadcast %cst_114 : f32 to vector<16x24xf32>
    %194 = arith.subf %193, %192 : vector<16x24xf32>
    %195 = arith.mulf %194, %177 : vector<16x24xf32>
    %cst_115 = arith.constant 0.000000e+00 : f32
    %196 = vector.broadcast %cst_115 : f32 to vector<16x24xf32>
    %197 = arith.subf %196, %184 : vector<16x24xf32>
    %198 = arith.mulf %197, %182 : vector<16x24xf32>
    %199 = arith.mulf %181, %181 : vector<16x24xf32>
    %cst_116 = arith.constant 1.000000e+00 : f32
    %200 = vector.broadcast %cst_116 : f32 to vector<16x24xf32>
    %201 = arith.addf %200, %199 : vector<16x24xf32>
    %202 = arith.mulf %201, %186 : vector<16x24xf32>
    %203 = arith.subf %198, %202 : vector<16x24xf32>
    %204 = arith.mulf %5, %5 : vector<16x24xf32>
    %cst_117 = arith.constant 1.000000e+00 : f32
    %205 = vector.broadcast %cst_117 : f32 to vector<16x24xf32>
    %206 = arith.addf %205, %204 : vector<16x24xf32>
    %207 = arith.mulf %206, %184 : vector<16x24xf32>
    %208 = arith.mulf %186, %182 : vector<16x24xf32>
    %209 = arith.addf %207, %208 : vector<16x24xf32>
    %210 = arith.mulf %186, %5 : vector<16x24xf32>
    %211 = arith.mulf %184, %181 : vector<16x24xf32>
    %212 = arith.subf %210, %211 : vector<16x24xf32>
    %213 = tpu.concatenate %188, %189, %195, %203, %209, %212, %187 in 0 : vector<16x24xf32>, vector<16x24xf32>, vector<16x24xf32>, vector<16x24xf32>, vector<16x24xf32>, vector<16x24xf32>, vector<16x24xf32> -> vector<112x24xf32>
    %c8_i32 = arith.constant 8 : i32
    %214 = vector.broadcast %c8_i32 : i32 to vector<112x24xi32>
    %215 = arith.addi %10, %214 : vector<112x24xi32>
    %c16_i32 = arith.constant 16 : i32
    %216 = vector.broadcast %c16_i32 : i32 to vector<112x24xi32>
    %217 = arith.cmpi sge, %215, %216 : vector<112x24xi32>
    %cst_118 = arith.constant 0.000000e+00 : f32
    %218 = vector.broadcast %cst_118 : f32 to vector<112x24xf32>
    %219 = arith.select %217, %213, %218 : vector<112x24xi1>, vector<112x24xf32>
    %cst_119 = arith.constant dense<0.000000e+00> : vector<112x112xf32>
    %220 = tpu.matmul %219, %219, %cst_119 {dimension_numbers = #tpu.dot_dimension_numbers<[1], [1], [0], [0], [0, 0, 1, 0], [], []>} : vector<112x24xf32>, vector<112x24xf32>, vector<112x112xf32> -> vector<112x112xf32>
    %221 = arith.addf %113, %220 : vector<112x112xf32>
    %222 = tpu.iota {dimensions = array<i32: 0>} : vector<112x112xi32>
    %223 = tpu.iota {dimensions = array<i32: 1>} : vector<112x112xi32>
    %c15_i32_120 = arith.constant 15 : i32
    %224 = vector.broadcast %c15_i32_120 : i32 to vector<112x112xi32>
    %225 = arith.andi %222, %224 : vector<112x112xi32>
    %c15_i32_121 = arith.constant 15 : i32
    %226 = vector.broadcast %c15_i32_121 : i32 to vector<112x112xi32>
    %227 = arith.andi %223, %226 : vector<112x112xi32>
    %228 = arith.cmpi eq, %225, %227 : vector<112x112xi32>
    %cst_122 = arith.constant 0.000000e+00 : f32
    %229 = vector.broadcast %cst_122 : f32 to vector<112x112xf32>
    %230 = arith.select %228, %221, %229 : vector<112x112xi1>, vector<112x112xf32>
    %231 = tpu.iota {dimensions = array<i32: 0>} : vector<7x112xi32>
    %232 = tpu.iota {dimensions = array<i32: 1>} : vector<7x112xi32>
    %c4_i32 = arith.constant 4 : i32
    %233 = vector.broadcast %c4_i32 : i32 to vector<7x112xi32>
    %234 = arith.shrsi %232, %233 : vector<7x112xi32>
    %235 = arith.cmpi eq, %231, %234 : vector<7x112xi32>
    %236 = arith.extui %235 : vector<7x112xi1> to vector<7x112xi32>
    %237 = arith.sitofp %236 : vector<7x112xi32> to vector<7x112xf32>
    %cst_123 = arith.constant dense<0.000000e+00> : vector<112x7xf32>
    %238 = tpu.matmul %230, %237, %cst_123 {dimension_numbers = #tpu.dot_dimension_numbers<[1], [1], [0], [0], [0, 0, 1, 0], [], []>} : vector<112x112xf32>, vector<7x112xf32>, vector<112x7xf32> -> vector<112x7xf32>
    %cst_124 = arith.constant dense<0.000000e+00> : vector<7x7xf32>
    %239 = tpu.matmul %237, %238, %cst_124 {dimension_numbers = #tpu.dot_dimension_numbers<[1], [0], [0], [1], [0, 0, 1, 1], [], []>} : vector<7x112xf32>, vector<112x7xf32>, vector<7x7xf32> -> vector<7x7xf32>
    %c0_125 = arith.constant 0 : index
    %c0_126 = arith.constant 0 : index
    %c0_127 = arith.constant 0 : index
    %240 = vector.load %arg4[%c0_125, %c0_126, %c0_127] : memref<1x7x7xf32, #tpu.memory_space<vmem>>, vector<1x7x7xf32>
    %241 = vector.shape_cast %240 : vector<1x7x7xf32> to vector<7x7xf32>
    %242 = vector.shape_cast %239 : vector<7x7xf32> to vector<1x7x7xf32>
    tpu.vector_store %arg4[%c0_125, %c0_126, %c0_127], %242 {strides = array<i32>} : memref<1x7x7xf32, #tpu.memory_space<vmem>>, vector<1x7x7xf32>,
    return
  }
  func.func @transform_0(%arg0: i32) -> (i32, i32, i32) {
    %c0_i32 = arith.constant 0 : i32
    %c0_i32_0 = arith.constant 0 : i32
    %c0_i32_1 = arith.constant 0 : i32
    return %arg0, %c0_i32, %c0_i32_0 : i32, i32, i32
  }
  func.func @transform_1(%arg0: i32) -> (i32, i32, i32) {
    %c0_i32 = arith.constant 0 : i32
    %c0_i32_0 = arith.constant 0 : i32
    %c0_i32_1 = arith.constant 0 : i32
    return %arg0, %c0_i32, %c0_i32_0 : i32, i32, i32
  }
  func.func @transform_2(%arg0: i32) -> (i32, i32, i32) {
    %c0_i32 = arith.constant 0 : i32
    %c0_i32_0 = arith.constant 0 : i32
    %c0_i32_1 = arith.constant 0 : i32
    return %arg0, %c0_i32, %c0_i32_0 : i32, i32, i32
  }
  func.func @transform_3(%arg0: i32) -> (i32, i32, i32) {
    %c0_i32 = arith.constant 0 : i32
    %c0_i32_0 = arith.constant 0 : i32
    %c0_i32_1 = arith.constant 0 : i32
    return %arg0, %c0_i32, %c0_i32_0 : i32, i32, i32
  }
}

</mosaic_0001>

<llo_original>
// kernel: tpu_custom_call.1
$region0: #{tpu_custom_call.1}
  #allocation0 [shape = 'u32[]', space=smem, size = 0x4, offset = 0x4, fixed_abs, tag = 'smem constant byte address 0x4 - core index']
  #allocation1 [shape = 'u32[144,128]{1,0:T(1,128)}', space=vmem, size = 0x12000, scoped, tag = 'internal scratch']
  %s0 = inlined_call_operand.hbm [shape: f32[2,32,32], index: 0, kind: input, shape index: {}]
  %s1 = inlined_call_operand.hbm [shape: f32[2,32,32], index: 1, kind: input, shape index: {}]
  %s2 = inlined_call_operand.hbm [shape: f32[2,32,32], index: 2, kind: input, shape index: {}]
  %s3 = inlined_call_operand.vmem [shape: f32[2,7,7], index: 3, kind: output, shape index: {}]
  %s4 = sld [smem:[#allocation0]]
  $region57: #{tpu_custom_call.1} parent=0
    _
  %s6 = ssub.s32 1, %s4
  %s7 = scalar_select 0, %s6, %s4
  $region1: #{tpu_custom_call.1} parent=0
    #allocation2 [shape = 'u8[32768]{0}', space=vmem, size = 0x8000, scoped, tag = 'input window, operand 0']
    #allocation3 [shape = 's32[2]{0}', space=sflag, size = 0x8, scoped, tag = 'scoped memory for tpu_custom_call.1']
    #allocation4 [shape = 'u8[32768]{0}', space=vmem, size = 0x8000, scoped, tag = 'input window, operand 1']
    #allocation5 [shape = 's32[2]{0}', space=sflag, size = 0x8, scoped, tag = 'scoped memory for tpu_custom_call.1']
    #allocation6 [shape = 'u8[32768]{0}', space=vmem, size = 0x8000, scoped, tag = 'input window, operand 2']
    %8 = vsyncpa [#allocation3], 0
    %s9 = scalar_lea.sflag [#allocation3], 1
    %10 = vsyncpa %s9, 0
    %11 = vsyncpa [#allocation5], 0
    %s12 = scalar_lea.sflag [#allocation5], 1
    %13 = vsyncpa %s12, 0
    loop: start=0, step=1, limit=4
    $region2: #{tpu_custom_call.1} parent=1 // loop_pre_header
      _
    $region3: #{tpu_custom_call.1} parent=1 // loop_header
      %s15 = sphi 0, %s19
      %p16 = scmp.ge.s32.totalorder %s15, 4
      %s25 = sphi 0, %s27
      %s28 = sphi 0, %s25
      %s29 = sphi 0, %s28
      %s45 = sphi 0, %s29
      %s51 = sphi 0, %s53
      %s54 = sphi 0, %s51
      %s55 = sphi 0, %s54
      %s71 = sphi 0, %s55
      %s77 = sphi 0, %s79
      %s80 = sphi 0, %s77
      %s81 = sphi 0, %s80
      %s97 = sphi 0, %s81
      %s103 = sphi 0, %s105
      %s106 = sphi 0, %s103
      %s107 = sphi 0, %s106
      %s123 = sphi 0, %s107
    $region4: #{tpu_custom_call.1} parent=1 // loop_header_branch
      %18 = sbr.rel (%p16) target = $region8
    $region5: #{tpu_custom_call.1} parent=1 // loop_body
      %s20 = ssub.s32 %s15, 1
      %s21 = ssub.s32 %s15, 2
      %s22 = sadd.s32 %s15, 1
      %s23 = ssub.s32 %s15, %s22
      %p24 = scmp.eq.s32.totalorder %s23, 0
      %s26 = sadd.s32 %s25, 1
      %s27 = scalar_select %p24, %s25, %s26
      %p30 = pneg %p24
      %p31 = scmp.eq.s32.totalorder %s15, 1
      %p32 = por %p30, %p31
      %p33 = scmp.ne.s32.totalorder %s25, %s28
      %p34 = scmp.eq.s32.totalorder %s15, 0
      %p35 = por %p33, %p34
      %p36 = scmp.ne.s32.totalorder %s25, %s28
      %p37 = scmp.eq.s32.totalorder %s20, 1
      %p38 = por %p36, %p37
      %p39 = scmp.ne.s32.totalorder %s28, %s29
      %p40 = scmp.eq.s32.totalorder %s20, 0
      %p41 = por %p39, %p40
      %p42 = scmp.ne.s32.totalorder %s28, %s29
      %p43 = scmp.eq.s32.totalorder %s21, 1
      %p44 = por %p42, %p43
      %p46 = scmp.ne.s32.totalorder %s29, %s45
      %p47 = scmp.eq.s32.totalorder %s21, 0
      %p48 = por %p46, %p47
      %s49 = ssub.s32 %s15, %s22
      %p50 = scmp.eq.s32.totalorder %s49, 0
      %s52 = sadd.s32 %s51, 1
      %s53 = scalar_select %p50, %s51, %s52
      %p56 = pneg %p50
      %p57 = scmp.eq.s32.totalorder %s15, 1
      %p58 = por %p56, %p57
      %p59 = scmp.ne.s32.totalorder %s51, %s54
      %p60 = scmp.eq.s32.totalorder %s15, 0
      %p61 = por %p59, %p60
      %p62 = scmp.ne.s32.totalorder %s51, %s54
      %p63 = scmp.eq.s32.totalorder %s20, 1
      %p64 = por %p62, %p63
      %p65 = scmp.ne.s32.totalorder %s54, %s55
      %p66 = scmp.eq.s32.totalorder %s20, 0
      %p67 = por %p65, %p66
      %p68 = scmp.ne.s32.totalorder %s54, %s55
      %p69 = scmp.eq.s32.totalorder %s21, 1
      %p70 = por %p68, %p69
      %p72 = scmp.ne.s32.totalorder %s55, %s71
      %p73 = scmp.eq.s32.totalorder %s21, 0
      %p74 = por %p72, %p73
      %s75 = ssub.s32 %s15, %s22
      %p76 = scmp.eq.s32.totalorder %s75, 0
      %s78 = sadd.s32 %s77, 1
      %s79 = scalar_select %p76, %s77, %s78
      %p82 = pneg %p76
      %p83 = scmp.eq.s32.totalorder %s15, 1
      %p84 = por %p82, %p83
      %p85 = scmp.ne.s32.totalorder %s77, %s80
      %p86 = scmp.eq.s32.totalorder %s15, 0
      %p87 = por %p85, %p86
      %p88 = scmp.ne.s32.totalorder %s77, %s80
      %p89 = scmp.eq.s32.totalorder %s20, 1
      %p90 = por %p88, %p89
      %p91 = scmp.ne.s32.totalorder %s80, %s81
      %p92 = scmp.eq.s32.totalorder %s20, 0
      %p93 = por %p91, %p92
      %p94 = scmp.ne.s32.totalorder %s80, %s81
      %p95 = scmp.eq.s32.totalorder %s21, 1
      %p96 = por %p94, %p95
      %p98 = scmp.ne.s32.totalorder %s81, %s97
      %p99 = scmp.eq.s32.totalorder %s21, 0
      %p100 = por %p98, %p99
      %s101 = ssub.s32 %s15, %s22
      %p102 = scmp.eq.s32.totalorder %s101, 0
      %s104 = sadd.s32 %s103, 1
      %s105 = scalar_select %p102, %s103, %s104
      %p108 = pneg %p102
      %p109 = scmp.eq.s32.totalorder %s15, 1
      %p110 = por %p108, %p109
      %p111 = scmp.ne.s32.totalorder %s103, %s106
      %p112 = scmp.eq.s32.totalorder %s15, 0
      %p113 = por %p111, %p112
      %p114 = scmp.ne.s32.totalorder %s103, %s106
      %p115 = scmp.eq.s32.totalorder %s20, 1
      %p116 = por %p114, %p115
      %p117 = scmp.ne.s32.totalorder %s106, %s107
      %p118 = scmp.eq.s32.totalorder %s20, 0
      %p119 = por %p117, %p118
      %p120 = scmp.ne.s32.totalorder %s106, %s107
      %p121 = scmp.eq.s32.totalorder %s21, 1
      %p122 = por %p120, %p121
      %p124 = scmp.ne.s32.totalorder %s107, %s123
      %p125 = scmp.eq.s32.totalorder %s21, 0
      %p126 = por %p124, %p125
      %p127 = scmp.le.s32.totalorder 1, %s15
      %p128 = scmp.lt.s32.totalorder %s15, 3
      %p129 = pnand %p127, %p128
      %p130 = pneg %p129
      // Predicated region
      $region9: #{tpu_custom_call.1} parent=5 // pred_check
        _
      $region10: #{tpu_custom_call.1} parent=5 // pred_check_branch
        %132 = sbr.rel (%p129) target = $region12
      $region11: #{tpu_custom_call.1} parent=5 // pred_region
        %s133 = ssub.s32 %s15, 1
      $region12: #{tpu_custom_call.1} parent=5 // pred_fallthru
        _
      %p134 = scmp.lt.s32.totalorder %s15, 2
      // Predicated region
      $region13: #{tpu_custom_call.1} parent=5 // pred_check
        %p135 = pneg %p134
      $region14: #{tpu_custom_call.1} parent=5 // pred_check_branch
        %137 = sbr.rel (%p135) target = $region16
      $region15: #{tpu_custom_call.1} parent=5 // pred_region
        // Predicated region
        $region17: #{tpu_custom_call.1} parent=15 // pred_check
          %p138 = pneg %p35
        $region18: #{tpu_custom_call.1} parent=15 // pred_check_branch
          %140 = sbr.rel (%p138) target = $region20
        $region19: #{tpu_custom_call.1} parent=15 // pred_region
          %s141 = sand.u32 %s25, 1
          %s142 = scalar_lea.sflag [#allocation3], %s141
          %s143 = sand.u32 %s25, 1
          %s144 = smul.addr %s143, 32
          %s145 = scalar_lea.vmem [#allocation2], %s144
          %s147 = ssub.s32 512, 512
          %148 = vsyncadd %s142, %s147
          %s149 = smul.addr %s15, 4
          %s150 = smul.addr %s149, 128
          %s151 = scalar_lea.hbm %s0, %s150
          %s152 = sshll.u32 %s145, 4
          %s153 = int_to_ptr.vmem [resolvable:$true] %s152
          %158 = dma.hbm_to_vmem [thread:$0]  %s151, 512, %s153, %s142, 128, 128, 8
        $region20: #{tpu_custom_call.1} parent=15 // pred_fallthru
          _
        // Predicated region
        $region21: #{tpu_custom_call.1} parent=15 // pred_check
          %p159 = pneg %p61
        $region22: #{tpu_custom_call.1} parent=15 // pred_check_branch
          %161 = sbr.rel (%p159) target = $region24
        $region23: #{tpu_custom_call.1} parent=15 // pred_region
          %s162 = sand.u32 %s15, 1
          %s163 = scalar_lea.sflag [#allocation5], %s162
          %s164 = sand.u32 %s51, 1
          %s165 = smul.addr %s164, 32
          %s166 = scalar_lea.vmem [#allocation4], %s165
          %s168 = ssub.s32 512, 512
          %169 = vsyncadd %s163, %s168
          %s170 = smul.addr %s15, 4
          %s171 = smul.addr %s170, 128
          %s172 = scalar_lea.hbm %s1, %s171
          %s173 = sshll.u32 %s166, 4
          %s174 = int_to_ptr.vmem [resolvable:$true] %s173
          %179 = dma.hbm_to_vmem [thread:$0]  %s172, 512, %s174, %s163, 128, 128, 8
        $region24: #{tpu_custom_call.1} parent=15 // pred_fallthru
          _
        // Predicated region
        $region25: #{tpu_custom_call.1} parent=15 // pred_check
          %p180 = pneg %p87
        $region26: #{tpu_custom_call.1} parent=15 // pred_check_branch
          %182 = sbr.rel (%p180) target = $region28
        $region27: #{tpu_custom_call.1} parent=15 // pred_region
          %s183 = sand.u32 %s15, 1
          %s184 = scalar_lea.sflag [#allocation5], %s183
          %s185 = sand.u32 %s77, 1
          %s186 = smul.addr %s185, 32
          %s187 = scalar_lea.vmem [#allocation6], %s186
          %s189 = ssub.s32 512, 512
          %190 = vsyncadd %s184, %s189
          %s191 = smul.addr %s15, 4
          %s192 = smul.addr %s191, 128
          %s193 = scalar_lea.hbm %s2, %s192
          %s194 = sshll.u32 %s187, 4
          %s195 = int_to_ptr.vmem [resolvable:$true] %s194
          %200 = dma.hbm_to_vmem [thread:$0]  %s193, 512, %s195, %s184, 128, 128, 8
        $region28: #{tpu_custom_call.1} parent=15 // pred_fallthru
          _
      $region16: #{tpu_custom_call.1} parent=5 // pred_fallthru
        _
      %p201 = scmp.le.s32.totalorder 1, %s15
      %p202 = scmp.lt.s32.totalorder %s15, 3
      %p203 = pnand %p201, %p202
      %p204 = pneg %p203
      // Predicated region
      $region29: #{tpu_custom_call.1} parent=5 // pred_check
        _
      $region30: #{tpu_custom_call.1} parent=5 // pred_check_branch
        %206 = sbr.rel (%p203) target = $region32
      $region31: #{tpu_custom_call.1} parent=5 // pred_region
        %s207 = ssub.s32 %s15, 1
        %s208 = sand.u32 %s28, 1
        %s209 = scalar_lea.sflag [#allocation3], %s208
        %s210 = sand.u32 %s28, 1
        %s211 = smul.addr %s210, 32
        %s212 = scalar_lea.vmem [#allocation2], %s211
        // Predicated region
        $region33: #{tpu_custom_call.1} parent=31 // pred_check
          %p213 = pneg %p41
        $region34: #{tpu_custom_call.1} parent=31 // pred_check_branch
          %215 = sbr.rel (%p213) target = $region36
        $region35: #{tpu_custom_call.1} parent=31 // pred_region
          %216 = dma.done %s209, 512
        $region36: #{tpu_custom_call.1} parent=31 // pred_fallthru
          _
        %s217 = sand.u32 %s20, 1
        %s218 = scalar_lea.sflag [#allocation5], %s217
        %s219 = sand.u32 %s54, 1
        %s220 = smul.addr %s219, 32
        %s221 = scalar_lea.vmem [#allocation4], %s220
        // Predicated region
        $region37: #{tpu_custom_call.1} parent=31 // pred_check
          %p222 = pneg %p67
        $region38: #{tpu_custom_call.1} parent=31 // pred_check_branch
          %224 = sbr.rel (%p222) target = $region40
        $region39: #{tpu_custom_call.1} parent=31 // pred_region
          %225 = dma.done %s218, 512
        $region40: #{tpu_custom_call.1} parent=31 // pred_fallthru
          _
        %s226 = sand.u32 %s20, 1
        %s227 = scalar_lea.sflag [#allocation5], %s226
        %s228 = sand.u32 %s80, 1
        %s229 = smul.addr %s228, 32
        %s230 = scalar_lea.vmem [#allocation6], %s229
        // Predicated region
        $region41: #{tpu_custom_call.1} parent=31 // pred_check
          %p231 = pneg %p93
        $region42: #{tpu_custom_call.1} parent=31 // pred_check_branch
          %233 = sbr.rel (%p231) target = $region44
        $region43: #{tpu_custom_call.1} parent=31 // pred_region
          %234 = dma.done %s227, 512
        $region44: #{tpu_custom_call.1} parent=31 // pred_fallthru
          _
        %s235 = sand.u32 %s28, 1
        %s236 = scalar_lea.sflag [#allocation3], %s235
        %s237 = sand.u32 %s28, 1
        %s238 = smul.addr %s237, 32
        %s239 = scalar_lea.vmem [#allocation2], %s238
        %p240 = pneg %p41
        %p241 = pneg %p38
        %s242 = sand.u32 %s20, 1
        %s243 = scalar_lea.sflag [#allocation5], %s242
        %s244 = sand.u32 %s54, 1
        %s245 = smul.addr %s244, 32
        %s246 = scalar_lea.vmem [#allocation4], %s245
        %p247 = pneg %p67
        %p248 = pneg %p64
        %s249 = sand.u32 %s20, 1
        %s250 = scalar_lea.sflag [#allocation5], %s249
        %s251 = sand.u32 %s80, 1
        %s252 = smul.addr %s251, 32
        %s253 = scalar_lea.vmem [#allocation6], %s252
        %p254 = pneg %p93
        %p255 = pneg %p90
        %p256 = pneg %p119
        %p257 = pneg %p116
        %p258 = scmp.lt.s32.totalorder %s20, 1
        %s259 = scalar_select %p258, %s20, 1
        %s260 = smul.addr %s259, 8
        %s261 = scalar_lea.vmem %s3, %s260
        %p262 = scmp.lt.s32.totalorder %s20, 1
        %s263 = scalar_select %p262, %s20, 1
        %s264 = smul.addr %s263, 8
        %s265 = scalar_lea.vmem %s3, %s264
        %v266 = vlaneseq
        %v267 = vand.u32 %v266, 127
        %v268 = vcvt.s32.f32 %v267
        %v269 = vadd.f32 %v268, -12.0
        %v270 = vmul.f32 %v269, 0.0033333334
        %v271 = vlaneseq
        %v272 = vshrl.u32 %v271, 7
        %v273 = vadd.s32 %v272, 8
        %v274 = vcvt.s32.f32 %v272
        %v275 = vcvt.s32.f32 %v273
        %v276 = vadd.s32 %v272, 16
        %v277 = vadd.s32 %v272, 24
        %v278 = vadd.s32 %v272, 32
        %v279 = vadd.s32 %v272, 40
        %v280 = vadd.s32 %v272, 48
        %v281 = vadd.s32 %v272, 56
        %v282 = vadd.s32 %v272, 64
        %v283 = vadd.s32 %v272, 72
        %v284 = vadd.s32 %v272, 80
        %v285 = vadd.s32 %v272, 88
        %v286 = vadd.s32 %v272, 96
        %v287 = vadd.s32 %v272, 104
        %v288 = vand.u32 %v272, 15
        %v289 = vand.u32 %v273, 15
        %v290 = vand.u32 %v276, 15
        %v291 = vand.u32 %v277, 15
        %v292 = vand.u32 %v278, 15
        %v293 = vand.u32 %v279, 15
        %v294 = vand.u32 %v280, 15
        %v295 = vand.u32 %v281, 15
        %v296 = vand.u32 %v282, 15
        %v297 = vand.u32 %v283, 15
        %v298 = vand.u32 %v284, 15
        %v299 = vand.u32 %v285, 15
        %v300 = vand.u32 %v286, 15
        %v301 = vand.u32 %v287, 15
        %v302 = vld [vmem:[%s221 + $0x4] sm:$0xff]
        %v303 = vld [vmem:[%s221 + $0xc] sm:$0xff]
        %v304 = vmul.f32 %v302, -0.013304823
        %v305 = vmul.f32 %v303, -0.013304823
        %v306 = vld [vmem:[%s221 + $0x1] sm:$0xff]
        %v307 = vld [vmem:[%s221 + $0x9] sm:$0xff]
        %v308 = vmul.f32 %v306, -0.013304823
        %v309 = vmul.f32 %v307, -0.013304823
        %v310 = vmul.f32 %v302, -0.108458064
        %v311 = vmul.f32 %v303, -0.108458064
        %314 = vrot.lane.b32.xlu0 %v310, 127
        %v315 = vpop.permute.xlu0 %314
        %316 = vrot.lane.b32.xlu0 %v311, 127
        %v317 = vpop.permute.xlu0 %316
        %v320 = vadd.f32 %v304, %v315
        %v321 = vadd.f32 %v305, %v317
        %v322 = vld [vmem:[%s221 + $0x2] sm:$0xff]
        %v323 = vld [vmem:[%s221 + $0xa] sm:$0xff]
        %v324 = vmul.f32 %v322, -0.108458064
        %v325 = vmul.f32 %v323, -0.108458064
        %v326 = vadd.f32 %v308, %v324
        %v327 = vadd.f32 %v309, %v325
        %v328 = vmul.f32 %v302, -0.2431694
        %v329 = vmul.f32 %v303, -0.2431694
        %332 = vrot.lane.b32.xlu0 %v328, 126
        %v333 = vpop.permute.xlu0 %332
        %334 = vrot.lane.b32.xlu0 %v329, 126
        %v335 = vpop.permute.xlu0 %334
        %v338 = vadd.f32 %v320, %v333
        %v339 = vadd.f32 %v321, %v335
        %v340 = vld [vmem:[%s221 + $0x3] sm:$0xff]
        %v341 = vld [vmem:[%s221 + $0xb] sm:$0xff]
        %v342 = vmul.f32 %v340, -0.2431694
        %v343 = vmul.f32 %v341, -0.2431694
        %v344 = vadd.f32 %v326, %v342
        %v345 = vadd.f32 %v327, %v343
        %v346 = vmul.f32 %v302, 0.2431694
        %v347 = vmul.f32 %v303, 0.2431694
        %350 = vrot.lane.b32.xlu0 %v346, 124
        %v351 = vpop.permute.xlu0 %350
        %352 = vrot.lane.b32.xlu0 %v347, 124
        %v353 = vpop.permute.xlu0 %352
        %v356 = vadd.f32 %v338, %v351
        %v357 = vadd.f32 %v339, %v353
        %v358 = vld [vmem:[%s221 + $0x5] sm:$0xff]
        %v359 = vld [vmem:[%s221 + $0xd] sm:$0xff]
        %v360 = vmul.f32 %v358, 0.2431694
        %v361 = vmul.f32 %v359, 0.2431694
        %v362 = vadd.f32 %v344, %v360
        %v363 = vadd.f32 %v345, %v361
        %v364 = vmul.f32 %v302, 0.108458064
        %v365 = vmul.f32 %v303, 0.108458064
        %368 = vrot.lane.b32.xlu0 %v364, 123
        %v369 = vpop.permute.xlu0 %368
        %370 = vrot.lane.b32.xlu0 %v365, 123
        %v371 = vpop.permute.xlu0 %370
        %v374 = vadd.f32 %v356, %v369
        %v375 = vadd.f32 %v357, %v371
        %v376 = vld [vmem:[%s221 + $0x6] sm:$0xff]
        %v377 = vld [vmem:[%s221 + $0xe] sm:$0xff]
        %v378 = vmul.f32 %v376, 0.108458064
        %v379 = vmul.f32 %v377, 0.108458064
        %v380 = vadd.f32 %v362, %v378
        %v381 = vadd.f32 %v363, %v379
        %v382 = vmul.f32 %v302, 0.013304823
        %v383 = vmul.f32 %v303, 0.013304823
        %386 = vrot.lane.b32.xlu0 %v382, 122
        %v387 = vpop.permute.xlu0 %386
        %388 = vrot.lane.b32.xlu0 %v383, 122
        %v389 = vpop.permute.xlu0 %388
        %v392 = vadd.f32 %v374, %v387
        %v393 = vadd.f32 %v375, %v389
        %v394 = vld [vmem:[%s221 + $0x7] sm:$0xff]
        %v395 = vld [vmem:[%s221 + $0xf] sm:$0xff]
        %v396 = vmul.f32 %v394, 0.013304823
        %v397 = vmul.f32 %v395, 0.013304823
        %v398 = vadd.f32 %v380, %v396
        %v399 = vadd.f32 %v381, %v397
        %v400 = vld [vmem:[%s212 + $0x4] sm:$0xff]
        %v401 = vld [vmem:[%s212 + $0xc] sm:$0xff]
        %v402 = vld [vmem:[%s230 + $0x4] sm:$0xff]
        %v403 = vld [vmem:[%s230 + $0xc] sm:$0xff]
        %v404 = vadd.f32 %v274, -12.0
        %v405 = vadd.f32 %v275, -12.0
        %v406 = vmul.f32 %v404, 0.0033333334
        %v407 = vmul.f32 %v405, 0.0033333334
        %v408 = vmul.f32 %v270, %v406
        %v409 = vmul.f32 %v270, %v407
        %v410 = vmul.f32 %v392, 300.0
        %v411 = vmul.f32 %v393, 300.0
        %v412 = vmul.f32 %v398, 300.0
        %v413 = vmul.f32 %v399, 300.0
        %v414 = vsub.f32 %v400, %v302
        %v415 = vsub.f32 %v401, %v303
        %418 = vrot.lane.b32.xlu0 %v402, 125
        %v419 = vpop.permute.xlu0 %418
        %420 = vrot.lane.b32.xlu0 %v403, 125
        %v421 = vpop.permute.xlu0 %420
        %v424 = vmul.f32 %v410, %v419
        %v425 = vmul.f32 %v411, %v421
        %v426 = vmul.f32 %v412, %v402
        %v427 = vmul.f32 %v413, %v403
        %430 = vrot.lane.b32.xlu0 %v410, 127
        %v431 = vpop.permute.xlu0 %430
        %432 = vrot.lane.b32.xlu0 %v411, 127
        %v433 = vpop.permute.xlu0 %432
        %v436 = vmul.f32 %v270, %v431
        %v437 = vmul.f32 %v270, %v433
        %v438 = vmul.f32 %v406, %v412
        %v439 = vmul.f32 %v407, %v413
        %442 = vrot.lane.b32.xlu0 %v438, 124
        %v443 = vpop.permute.xlu0 %442
        %444 = vrot.lane.b32.xlu0 %v439, 124
        %v445 = vpop.permute.xlu0 %444
        %v448 = vadd.f32 %v436, %v443
        %v449 = vadd.f32 %v437, %v445
        %v450 = vsub.f32 0.0, %v448
        %v451 = vsub.f32 0.0, %v449
        %452 = vrot.lane.b32.xlu0 %v402, 124
        %v453 = vpop.permute.xlu0 %452
        %454 = vrot.lane.b32.xlu0 %v403, 124
        %v455 = vpop.permute.xlu0 %454
        %v458 = vmul.f32 %v450, %v453
        %v459 = vmul.f32 %v451, %v455
        %v460 = vsub.f32 0.0, %v410
        %v461 = vsub.f32 0.0, %v411
        %464 = vrot.lane.b32.xlu0 %v408, 1
        %v465 = vpop.permute.xlu0 %464
        %466 = vrot.lane.b32.xlu0 %v409, 1
        %v467 = vpop.permute.xlu0 %466
        %v470 = vmul.f32 %v460, %v465
        %v471 = vmul.f32 %v461, %v467
        %v472 = vmul.f32 %v406, %v406
        %v473 = vmul.f32 %v407, %v407
        %v474 = vadd.f32 %v472, 1.0
        %v475 = vadd.f32 %v473, 1.0
        %v476 = vmul.f32 %v474, %v412
        %v477 = vmul.f32 %v475, %v413
        %480 = vrot.lane.b32.xlu0 %v476, 125
        %v481 = vpop.permute.xlu0 %480
        %482 = vrot.lane.b32.xlu0 %v477, 125
        %v483 = vpop.permute.xlu0 %482
        %v486 = vsub.f32 %v470, %v481
        %v487 = vsub.f32 %v471, %v483
        %v488 = vmul.f32 %v270, %v270
        %v489 = vadd.f32 %v488, 1.0
        %v490 = vmul.f32 %v489, %v431
        %v491 = vmul.f32 %v489, %v433
        %492 = vrot.lane.b32.xlu0 %v408, 4
        %v493 = vpop.permute.xlu0 %492
        %494 = vrot.lane.b32.xlu0 %v409, 4
        %v495 = vpop.permute.xlu0 %494
        %v498 = vmul.f32 %v412, %v493
        %v499 = vmul.f32 %v413, %v495
        %502 = vrot.lane.b32.xlu0 %v498, 124
        %v503 = vpop.permute.xlu0 %502
        %504 = vrot.lane.b32.xlu0 %v499, 124
        %v505 = vpop.permute.xlu0 %504
        %v508 = vadd.f32 %v490, %v503
        %v509 = vadd.f32 %v491, %v505
        %511 = vrot.lane.b32.xlu0 %v270, 4
        %v512 = vpop.permute.xlu0 %511
        %v514 = vmul.f32 %v412, %v512
        %v515 = vmul.f32 %v413, %v512
        %v516 = vmul.f32 %v410, %v406
        %v517 = vmul.f32 %v411, %v407
        %520 = vrot.lane.b32.xlu0 %v516, 3
        %v521 = vpop.permute.xlu0 %520
        %522 = vrot.lane.b32.xlu0 %v517, 3
        %v523 = vpop.permute.xlu0 %522
        %v526 = vsub.f32 %v514, %v521
        %v527 = vsub.f32 %v515, %v523
        %530 = vrot.lane.b32.xlu0 %v426, 125
        %v531 = vpop.permute.xlu0 %530
        %532 = vrot.lane.b32.xlu0 %v427, 125
        %v533 = vpop.permute.xlu0 %532
        %536 = vrot.lane.b32.xlu0 %v458, 1
        %v537 = vpop.permute.xlu0 %536
        %538 = vrot.lane.b32.xlu0 %v459, 1
        %v539 = vpop.permute.xlu0 %538
        %542 = vrot.lane.b32.xlu0 %v508, 1
        %v543 = vpop.permute.xlu0 %542
        %544 = vrot.lane.b32.xlu0 %v509, 1
        %v545 = vpop.permute.xlu0 %544
        %548 = vrot.lane.b32.xlu0 %v526, 125
        %v549 = vpop.permute.xlu0 %548
        %550 = vrot.lane.b32.xlu0 %v527, 125
        %v551 = vpop.permute.xlu0 %550
        %554 = vrot.lane.b32.xlu0 %v414, 125
        %v555 = vpop.permute.xlu0 %554
        %556 = vrot.lane.b32.xlu0 %v415, 125
        %v557 = vpop.permute.xlu0 %556
        %v558 = vld [vmem:[%s221 + $0x14] sm:$0xff]
        %v559 = vmul.f32 %v558, -0.013304823
        %v560 = vld [vmem:[%s221 + $0x11] sm:$0xff]
        %v561 = vmul.f32 %v560, -0.013304823
        %v562 = vmul.f32 %v558, -0.108458064
        %564 = vrot.lane.b32.xlu0 %v562, 127
        %v565 = vpop.permute.xlu0 %564
        %v567 = vadd.f32 %v559, %v565
        %v568 = vld [vmem:[%s221 + $0x12] sm:$0xff]
        %v569 = vmul.f32 %v568, -0.108458064
        %v570 = vadd.f32 %v561, %v569
        %v571 = vmul.f32 %v558, -0.2431694
        %573 = vrot.lane.b32.xlu0 %v571, 126
        %v574 = vpop.permute.xlu0 %573
        %v576 = vadd.f32 %v567, %v574
        %v577 = vld [vmem:[%s221 + $0x13] sm:$0xff]
        %v578 = vmul.f32 %v577, -0.2431694
        %v579 = vadd.f32 %v570, %v578
        %v580 = vmul.f32 %v558, 0.2431694
        %582 = vrot.lane.b32.xlu0 %v580, 124
        %v583 = vpop.permute.xlu0 %582
        %v585 = vadd.f32 %v576, %v583
        %v586 = vld [vmem:[%s221 + $0x15] sm:$0xff]
        %v587 = vmul.f32 %v586, 0.2431694
        %v588 = vadd.f32 %v579, %v587
        %v589 = vmul.f32 %v558, 0.108458064
        %591 = vrot.lane.b32.xlu0 %v589, 123
        %v592 = vpop.permute.xlu0 %591
        %v594 = vadd.f32 %v585, %v592
        %v595 = vld [vmem:[%s221 + $0x16] sm:$0xff]
        %v596 = vmul.f32 %v595, 0.108458064
        %v597 = vadd.f32 %v588, %v596
        %v598 = vmul.f32 %v558, 0.013304823
        %600 = vrot.lane.b32.xlu0 %v598, 122
        %v601 = vpop.permute.xlu0 %600
        %v603 = vadd.f32 %v594, %v601
        %v604 = vld [vmem:[%s221 + $0x17] sm:$0xff]
        %v605 = vmul.f32 %v604, 0.013304823
        %v606 = vadd.f32 %v597, %v605
        %v607 = vld [vmem:[%s212 + $0x14] sm:$0xff]
        %v608 = vld [vmem:[%s230 + $0x14] sm:$0xff]
        %v609 = vadd.f32 %v274, -4.0
        %v610 = vadd.f32 %v275, -4.0
        %v611 = vmul.f32 %v609, 0.0033333334
        %v612 = vmul.f32 %v610, 0.0033333334
        %v613 = vmul.f32 %v270, %v611
        %v614 = vmul.f32 %v270, %v612
        %v615 = vmul.f32 %v603, 300.0
        %v616 = vmul.f32 %v606, 300.0
        %v617 = vsub.f32 %v607, %v558
        %619 = vrot.lane.b32.xlu0 %v608, 125
        %v620 = vpop.permute.xlu0 %619
        %v622 = vmul.f32 %v615, %v620
        %v623 = vmul.f32 %v616, %v608
        %625 = vrot.lane.b32.xlu0 %v615, 127
        %v626 = vpop.permute.xlu0 %625
        %v628 = vmul.f32 %v270, %v626
        %v629 = vmul.f32 %v611, %v413
        %v630 = vmul.f32 %v612, %v616
        %633 = vrot.lane.b32.xlu0 %v629, 124
        %v634 = vpop.permute.xlu0 %633
        %635 = vrot.lane.b32.xlu0 %v630, 124
        %v636 = vpop.permute.xlu0 %635
        %v639 = vadd.f32 %v437, %v634
        %v640 = vadd.f32 %v628, %v636
        %v641 = vsub.f32 0.0, %v639
        %v642 = vsub.f32 0.0, %v640
        %643 = vrot.lane.b32.xlu0 %v608, 124
        %v644 = vpop.permute.xlu0 %643
        %v646 = vmul.f32 %v641, %v455
        %v647 = vmul.f32 %v642, %v644
        %v648 = vsub.f32 0.0, %v615
        %651 = vrot.lane.b32.xlu0 %v613, 1
        %v652 = vpop.permute.xlu0 %651
        %653 = vrot.lane.b32.xlu0 %v614, 1
        %v654 = vpop.permute.xlu0 %653
        %v657 = vmul.f32 %v461, %v652
        %v658 = vmul.f32 %v648, %v654
        %v659 = vmul.f32 %v611, %v611
        %v660 = vmul.f32 %v612, %v612
        %v661 = vadd.f32 %v659, 1.0
        %v662 = vadd.f32 %v660, 1.0
        %v663 = vmul.f32 %v661, %v413
        %v664 = vmul.f32 %v662, %v616
        %667 = vrot.lane.b32.xlu0 %v663, 125
        %v668 = vpop.permute.xlu0 %667
        %669 = vrot.lane.b32.xlu0 %v664, 125
        %v670 = vpop.permute.xlu0 %669
        %v673 = vsub.f32 %v657, %v668
        %v674 = vsub.f32 %v658, %v670
        %v675 = vmul.f32 %v489, %v626
        %676 = vrot.lane.b32.xlu0 %v613, 4
        %v677 = vpop.permute.xlu0 %676
        %678 = vrot.lane.b32.xlu0 %v614, 4
        %v679 = vpop.permute.xlu0 %678
        %v682 = vmul.f32 %v413, %v677
        %v683 = vmul.f32 %v616, %v679
        %686 = vrot.lane.b32.xlu0 %v682, 124
        %v687 = vpop.permute.xlu0 %686
        %688 = vrot.lane.b32.xlu0 %v683, 124
        %v689 = vpop.permute.xlu0 %688
        %v692 = vadd.f32 %v491, %v687
        %v693 = vadd.f32 %v675, %v689
        %v694 = vmul.f32 %v616, %v512
        %v695 = vmul.f32 %v411, %v611
        %v696 = vmul.f32 %v615, %v612
        %699 = vrot.lane.b32.xlu0 %v695, 3
        %v700 = vpop.permute.xlu0 %699
        %701 = vrot.lane.b32.xlu0 %v696, 3
        %v702 = vpop.permute.xlu0 %701
        %v705 = vsub.f32 %v515, %v700
        %v706 = vsub.f32 %v694, %v702
        %708 = vrot.lane.b32.xlu0 %v623, 125
        %v709 = vpop.permute.xlu0 %708
        %714 = vrot.lane.b32.xlu0 %v646, 1
        %v715 = vpop.permute.xlu0 %714
        %716 = vrot.lane.b32.xlu0 %v647, 1
        %v717 = vpop.permute.xlu0 %716
        %722 = vrot.lane.b32.xlu0 %v692, 1
        %v723 = vpop.permute.xlu0 %722
        %724 = vrot.lane.b32.xlu0 %v693, 1
        %v725 = vpop.permute.xlu0 %724
        %730 = vrot.lane.b32.xlu0 %v705, 125
        %v731 = vpop.permute.xlu0 %730
        %732 = vrot.lane.b32.xlu0 %v706, 125
        %v733 = vpop.permute.xlu0 %732
        %737 = vrot.lane.b32.xlu0 %v617, 125
        %v738 = vpop.permute.xlu0 %737
        %v741 = vadd.s32 %v288, 8
        %v742 = vadd.s32 %v289, 8
        %v743 = vadd.s32 %v290, 8
        %v744 = vadd.s32 %v291, 8
        %v745 = vadd.s32 %v292, 8
        %v746 = vadd.s32 %v293, 8
        %v747 = vadd.s32 %v294, 8
        %v748 = vadd.s32 %v295, 8
        %v749 = vadd.s32 %v296, 8
        %v750 = vadd.s32 %v297, 8
        %v751 = vadd.s32 %v298, 8
        %v752 = vadd.s32 %v299, 8
        %v753 = vadd.s32 %v300, 8
        %v754 = vadd.s32 %v301, 8
        %vm755 = vcmp.ge.s32.totalorder %v741, 16
        %vm756 = vcmp.ge.s32.totalorder %v742, 16
        %vm757 = vcmp.ge.s32.totalorder %v743, 16
        %vm758 = vcmp.ge.s32.totalorder %v744, 16
        %vm759 = vcmp.ge.s32.totalorder %v745, 16
        %vm760 = vcmp.ge.s32.totalorder %v746, 16
        %vm761 = vcmp.ge.s32.totalorder %v747, 16
        %vm762 = vcmp.ge.s32.totalorder %v748, 16
        %vm763 = vcmp.ge.s32.totalorder %v749, 16
        %vm764 = vcmp.ge.s32.totalorder %v750, 16
        %vm765 = vcmp.ge.s32.totalorder %v751, 16
        %vm766 = vcmp.ge.s32.totalorder %v752, 16
        %vm767 = vcmp.ge.s32.totalorder %v753, 16
        %vm768 = vcmp.ge.s32.totalorder %v754, 16
        %v769 = vsel %vm755, %v425, 0.0
        %v770 = vsel %vm756, %v622, 0.0
        %v771 = vsel %vm757, %v533, 0.0
        %v772 = vsel %vm758, %v709, 0.0
        %v773 = vsel %vm759, %v715, 0.0
        %v774 = vsel %vm760, %v717, 0.0
        %v775 = vsel %vm761, %v673, 0.0
        %v776 = vsel %vm762, %v674, 0.0
        %v777 = vsel %vm763, %v723, 0.0
        %v778 = vsel %vm764, %v725, 0.0
        %v779 = vsel %vm765, %v731, 0.0
        %v780 = vsel %vm766, %v733, 0.0
        %v781 = vsel %vm767, %v557, 0.0
        %v782 = vsel %vm768, %v738, 0.0
        %797 = vrot.lane.b32.xlu0 %v769, 127
        %v798 = vpop.permute.xlu0 %797
        %799 = vrot.lane.b32.xlu0 %v770, 127
        %v800 = vpop.permute.xlu0 %799
        %801 = vrot.lane.b32.xlu0 %v771, 127
        %v802 = vpop.permute.xlu0 %801
        %803 = vrot.lane.b32.xlu0 %v772, 127
        %v804 = vpop.permute.xlu0 %803
        %805 = vrot.lane.b32.xlu0 %v773, 127
        %v806 = vpop.permute.xlu0 %805
        %807 = vrot.lane.b32.xlu0 %v774, 127
        %v808 = vpop.permute.xlu0 %807
        %809 = vrot.lane.b32.xlu0 %v775, 127
        %v810 = vpop.permute.xlu0 %809
        %811 = vrot.lane.b32.xlu0 %v776, 127
        %v812 = vpop.permute.xlu0 %811
        %813 = vrot.lane.b32.xlu0 %v777, 127
        %v814 = vpop.permute.xlu0 %813
        %815 = vrot.lane.b32.xlu0 %v778, 127
        %v816 = vpop.permute.xlu0 %815
        %817 = vrot.lane.b32.xlu0 %v779, 127
        %v818 = vpop.permute.xlu0 %817
        %819 = vrot.lane.b32.xlu0 %v780, 127
        %v820 = vpop.permute.xlu0 %819
        %821 = vrot.lane.b32.xlu0 %v781, 127
        %v822 = vpop.permute.xlu0 %821
        %823 = vrot.lane.b32.xlu0 %v782, 127
        %v824 = vpop.permute.xlu0 %823
        %vm825 = vcmask 195584
        %v826 = vsel %vm825, %v798, 0
        %v828 = vsel %vm825, %v800, 0
        %v830 = vsel %vm825, %v802, 0
        %v832 = vsel %vm825, %v804, 0
        %v834 = vsel %vm825, %v806, 0
        %v836 = vsel %vm825, %v808, 0
        %v838 = vsel %vm825, %v810, 0
        %v840 = vsel %vm825, %v812, 0
        %v842 = vsel %vm825, %v814, 0
        %v844 = vsel %vm825, %v816, 0
        %v846 = vsel %vm825, %v818, 0
        %v848 = vsel %vm825, %v820, 0
        %v850 = vsel %vm825, %v822, 0
        %v852 = vsel %vm825, %v824, 0
        %854 = vmatprep.subr.mxu0 0.0
        %855 = vmatpush1.xpose.msra.mxu0 0.0
        %856 = vmatprep.subr.mxu0 0.0
        %857 = vmatpush1.xpose.msra.mxu0 0.0
        %858 = vmatprep.subr.mxu0 0.0
        %859 = vmatpush1.xpose.msra.mxu0 %v852
        %860 = vmatprep.subr.mxu0 0.0
        %861 = vmatpush1.xpose.msra.mxu0 %v850
        %862 = vmatprep.subr.mxu0 0.0
        %863 = vmatpush1.xpose.msra.mxu0 %v848
        %864 = vmatprep.subr.mxu0 0.0
        %865 = vmatpush1.xpose.msra.mxu0 %v846
        %866 = vmatprep.subr.mxu0 0.0
        %867 = vmatpush1.xpose.msra.mxu0 %v844
        %868 = vmatprep.subr.mxu0 0.0
        %869 = vmatpush1.xpose.msra.mxu0 %v842
        %870 = vmatprep.subr.mxu0 0.0
        %871 = vmatpush1.xpose.msra.mxu0 %v840
        %872 = vmatprep.subr.mxu0 0.0
        %873 = vmatpush1.xpose.msra.mxu0 %v838
        %874 = vmatprep.subr.mxu0 0.0
        %875 = vmatpush1.xpose.msra.mxu0 %v836
        %876 = vmatprep.subr.mxu0 0.0
        %877 = vmatpush1.xpose.msra.mxu0 %v834
        %878 = vmatprep.subr.mxu0 0.0
        %879 = vmatpush1.xpose.msra.mxu0 %v832
        %880 = vmatprep.subr.mxu0 0.0
        %881 = vmatpush1.xpose.msra.mxu0 %v830
        %882 = vmatprep.subr.mxu0 0.0
        %883 = vmatpush1.xpose.msra.mxu0 %v828
        %884 = vmatprep.subr.mxu0 0.0
        %885 = vmatpush1.xpose.msra.mxu0 %v826
        %886 = vmatprep.subr.mxu0 0.0
        %887 = vmatpush2.xpose.msra.mxu0 0.0
        %888 = vmatprep.subr.mxu0 0.0
        %889 = vmatpush2.xpose.msra.mxu0 0.0
        %890 = vmatprep.subr.mxu0 0.0
        %891 = vmatpush2.xpose.msra.mxu0 0.0
        %892 = vmatprep.subr.mxu0 0.0
        %893 = vmatpush2.xpose.msra.mxu0 0.0
        %894 = vmatprep.subr.mxu0 0.0
        %895 = vmatpush2.xpose.msra.mxu0 0.0
        %896 = vmatprep.subr.mxu0 0.0
        %897 = vmatpush2.xpose.msra.mxu0 0.0
        %898 = vmatprep.subr.mxu0 0.0
        %899 = vmatpush2.xpose.msra.mxu0 0.0
        %900 = vmatprep.subr.mxu0 0.0
        %901 = vmatpush2.xpose.msra.mxu0 0.0
        %902 = vmatprep.subr.mxu0 0.0
        %903 = vmatpush2.xpose.msra.mxu0 0.0
        %904 = vmatprep.subr.mxu0 0.0
        %905 = vmatpush2.xpose.msra.mxu0 0.0
        %906 = vmatprep.subr.mxu0 0.0
        %907 = vmatpush2.xpose.msra.mxu0 0.0
        %908 = vmatprep.subr.mxu0 0.0
        %909 = vmatpush2.xpose.msra.mxu0 0.0
        %910 = vmatprep.subr.mxu0 0.0
        %911 = vmatpush2.xpose.msra.mxu0 0.0
        %912 = vmatprep.subr.mxu0 0.0
        %913 = vmatpush2.xpose.msra.mxu0 0.0
        %914 = vmatprep.subr.mxu0 0.0
        %915 = vmatpush2.xpose.msra.mxu0 0.0
        %916 = vmatprep.subr.mxu0 0.0
        %917 = vmatpush2.xpose.msra.mxu0 0.0
        %918 = vmatprep.mubr.f32.mxu0 0.0
        %919 = vmatmul.mubr.f32.gmra.mxu0 %v826
        %v920 = vpop.f32.mrf.mxu0
        %v921 = vadd.f32 0.0, %v920
        %v922 = vpop.f32.mrf.mxu0
        %923 = vmatprep.mubr.f32.mxu0 0.0
        %924 = vmatmul.mubr.f32.gmra.mxu0 %v828
        %v925 = vpop.f32.mrf.mxu0
        %v926 = vadd.f32 0.0, %v925
        %v927 = vpop.f32.mrf.mxu0
        %928 = vmatprep.mubr.f32.mxu0 0.0
        %929 = vmatmul.mubr.f32.gmra.mxu0 %v830
        %v930 = vpop.f32.mrf.mxu0
        %v931 = vadd.f32 0.0, %v930
        %v932 = vpop.f32.mrf.mxu0
        %933 = vmatprep.mubr.f32.mxu0 0.0
        %934 = vmatmul.mubr.f32.gmra.mxu0 %v832
        %v935 = vpop.f32.mrf.mxu0
        %v936 = vadd.f32 0.0, %v935
        %v937 = vpop.f32.mrf.mxu0
        %938 = vmatprep.mubr.f32.mxu0 0.0
        %939 = vmatmul.mubr.f32.gmra.mxu0 %v834
        %v940 = vpop.f32.mrf.mxu0
        %v941 = vadd.f32 0.0, %v940
        %v942 = vpop.f32.mrf.mxu0
        %943 = vmatprep.mubr.f32.mxu0 0.0
        %944 = vmatmul.mubr.f32.gmra.mxu0 %v836
        %v945 = vpop.f32.mrf.mxu0
        %v946 = vadd.f32 0.0, %v945
        %v947 = vpop.f32.mrf.mxu0
        %948 = vmatprep.mubr.f32.mxu0 0.0
        %949 = vmatmul.mubr.f32.gmra.mxu0 %v838
        %v950 = vpop.f32.mrf.mxu0
        %v951 = vadd.f32 0.0, %v950
        %v952 = vpop.f32.mrf.mxu0
        %953 = vmatprep.mubr.f32.mxu0 0.0
        %954 = vmatmul.mubr.f32.gmra.mxu0 %v840
        %v955 = vpop.f32.mrf.mxu0
        %v956 = vadd.f32 0.0, %v955
        %v957 = vpop.f32.mrf.mxu0
        %958 = vmatprep.mubr.f32.mxu0 0.0
        %959 = vmatmul.mubr.f32.gmra.mxu0 %v842
        %v960 = vpop.f32.mrf.mxu0
        %v961 = vadd.f32 0.0, %v960
        %v962 = vpop.f32.mrf.mxu0
        %963 = vmatprep.mubr.f32.mxu0 0.0
        %964 = vmatmul.mubr.f32.gmra.mxu0 %v844
        %v965 = vpop.f32.mrf.mxu0
        %v966 = vadd.f32 0.0, %v965
        %v967 = vpop.f32.mrf.mxu0
        %968 = vmatprep.mubr.f32.mxu0 0.0
        %969 = vmatmul.mubr.f32.gmra.mxu0 %v846
        %v970 = vpop.f32.mrf.mxu0
        %v971 = vadd.f32 0.0, %v970
        %v972 = vpop.f32.mrf.mxu0
        %973 = vmatprep.mubr.f32.mxu0 0.0
        %974 = vmatmul.mubr.f32.gmra.mxu0 %v848
        %v975 = vpop.f32.mrf.mxu0
        %v976 = vadd.f32 0.0, %v975
        %v977 = vpop.f32.mrf.mxu0
        %978 = vmatprep.mubr.f32.mxu0 0.0
        %979 = vmatmul.mubr.f32.gmra.mxu0 %v850
        %v980 = vpop.f32.mrf.mxu0
        %v981 = vadd.f32 0.0, %v980
        %v982 = vpop.f32.mrf.mxu0
        %983 = vmatprep.mubr.f32.mxu0 0.0
        %984 = vmatmul.mubr.f32.gmra.mxu0 %v852
        %v985 = vpop.f32.mrf.mxu0
        %v986 = vadd.f32 0.0, %v985
        %v987 = vpop.f32.mrf.mxu0
        %988 = vdwg.mxu0
        %993 = vrot.lane.b32.xlu0 %v424, 127
        %v994 = vpop.permute.xlu0 %993
        %995 = vrot.lane.b32.xlu0 %v425, 127
        %v996 = vpop.permute.xlu0 %995
        %997 = vrot.lane.b32.xlu0 %v531, 127
        %v998 = vpop.permute.xlu0 %997
        %999 = vrot.lane.b32.xlu0 %v533, 127
        %v1000 = vpop.permute.xlu0 %999
        %1001 = vrot.lane.b32.xlu0 %v537, 127
        %v1002 = vpop.permute.xlu0 %1001
        %1003 = vrot.lane.b32.xlu0 %v539, 127
        %v1004 = vpop.permute.xlu0 %1003
        %1005 = vrot.lane.b32.xlu0 %v486, 127
        %v1006 = vpop.permute.xlu0 %1005
        %1007 = vrot.lane.b32.xlu0 %v487, 127
        %v1008 = vpop.permute.xlu0 %1007
        %1009 = vrot.lane.b32.xlu0 %v543, 127
        %v1010 = vpop.permute.xlu0 %1009
        %1011 = vrot.lane.b32.xlu0 %v545, 127
        %v1012 = vpop.permute.xlu0 %1011
        %1013 = vrot.lane.b32.xlu0 %v549, 127
        %v1014 = vpop.permute.xlu0 %1013
        %1015 = vrot.lane.b32.xlu0 %v551, 127
        %v1016 = vpop.permute.xlu0 %1015
        %1017 = vrot.lane.b32.xlu0 %v555, 127
        %v1018 = vpop.permute.xlu0 %1017
        %1019 = vrot.lane.b32.xlu0 %v557, 127
        %v1020 = vpop.permute.xlu0 %1019
        %v1021 = vsel %vm825, %v994, 0
        %v1023 = vsel %vm825, %v996, 0
        %v1025 = vsel %vm825, %v998, 0
        %v1027 = vsel %vm825, %v1000, 0
        %v1029 = vsel %vm825, %v1002, 0
        %v1031 = vsel %vm825, %v1004, 0
        %v1033 = vsel %vm825, %v1006, 0
        %v1035 = vsel %vm825, %v1008, 0
        %v1037 = vsel %vm825, %v1010, 0
        %v1039 = vsel %vm825, %v1012, 0
        %v1041 = vsel %vm825, %v1014, 0
        %v1043 = vsel %vm825, %v1016, 0
        %v1045 = vsel %vm825, %v1018, 0
        %v1047 = vsel %vm825, %v1020, 0
        %1049 = vmatprep.subr.mxu0 0.0
        %1050 = vmatpush1.xpose.msra.mxu0 0.0
        %1051 = vmatprep.subr.mxu0 0.0
        %1052 = vmatpush1.xpose.msra.mxu0 0.0
        %1053 = vmatprep.subr.mxu0 0.0
        %1054 = vmatpush1.xpose.msra.mxu0 %v1047
        %1055 = vmatprep.subr.mxu0 0.0
        %1056 = vmatpush1.xpose.msra.mxu0 %v1045
        %1057 = vmatprep.subr.mxu0 0.0
        %1058 = vmatpush1.xpose.msra.mxu0 %v1043
        %1059 = vmatprep.subr.mxu0 0.0
        %1060 = vmatpush1.xpose.msra.mxu0 %v1041
        %1061 = vmatprep.subr.mxu0 0.0
        %1062 = vmatpush1.xpose.msra.mxu0 %v1039
        %1063 = vmatprep.subr.mxu0 0.0
        %1064 = vmatpush1.xpose.msra.mxu0 %v1037
        %1065 = vmatprep.subr.mxu0 0.0
        %1066 = vmatpush1.xpose.msra.mxu0 %v1035
        %1067 = vmatprep.subr.mxu0 0.0
        %1068 = vmatpush1.xpose.msra.mxu0 %v1033
        %1069 = vmatprep.subr.mxu0 0.0
        %1070 = vmatpush1.xpose.msra.mxu0 %v1031
        %1071 = vmatprep.subr.mxu0 0.0
        %1072 = vmatpush1.xpose.msra.mxu0 %v1029
        %1073 = vmatprep.subr.mxu0 0.0
        %1074 = vmatpush1.xpose.msra.mxu0 %v1027
        %1075 = vmatprep.subr.mxu0 0.0
        %1076 = vmatpush1.xpose.msra.mxu0 %v1025
        %1077 = vmatprep.subr.mxu0 0.0
        %1078 = vmatpush1.xpose.msra.mxu0 %v1023
        %1079 = vmatprep.subr.mxu0 0.0
        %1080 = vmatpush1.xpose.msra.mxu0 %v1021
        %1081 = vmatprep.subr.mxu0 0.0
        %1082 = vmatpush2.xpose.msra.mxu0 0.0
        %1083 = vmatprep.subr.mxu0 0.0
        %1084 = vmatpush2.xpose.msra.mxu0 0.0
        %1085 = vmatprep.subr.mxu0 0.0
        %1086 = vmatpush2.xpose.msra.mxu0 0.0
        %1087 = vmatprep.subr.mxu0 0.0
        %1088 = vmatpush2.xpose.msra.mxu0 0.0
        %1089 = vmatprep.subr.mxu0 0.0
        %1090 = vmatpush2.xpose.msra.mxu0 0.0
        %1091 = vmatprep.subr.mxu0 0.0
        %1092 = vmatpush2.xpose.msra.mxu0 0.0
        %1093 = vmatprep.subr.mxu0 0.0
        %1094 = vmatpush2.xpose.msra.mxu0 0.0
        %1095 = vmatprep.subr.mxu0 0.0
        %1096 = vmatpush2.xpose.msra.mxu0 0.0
        %1097 = vmatprep.subr.mxu0 0.0
        %1098 = vmatpush2.xpose.msra.mxu0 0.0
        %1099 = vmatprep.subr.mxu0 0.0
        %1100 = vmatpush2.xpose.msra.mxu0 0.0
        %1101 = vmatprep.subr.mxu0 0.0
        %1102 = vmatpush2.xpose.msra.mxu0 0.0
        %1103 = vmatprep.subr.mxu0 0.0
        %1104 = vmatpush2.xpose.msra.mxu0 0.0
        %1105 = vmatprep.subr.mxu0 0.0
        %1106 = vmatpush2.xpose.msra.mxu0 0.0
        %1107 = vmatprep.subr.mxu0 0.0
        %1108 = vmatpush2.xpose.msra.mxu0 0.0
        %1109 = vmatprep.subr.mxu0 0.0
        %1110 = vmatpush2.xpose.msra.mxu0 0.0
        %1111 = vmatprep.subr.mxu0 0.0
        %1112 = vmatpush2.xpose.msra.mxu0 0.0
        %1113 = vmatprep.mubr.f32.mxu0 0.0
        %1114 = vmatmul.mubr.f32.gmra.mxu0 %v1021
        %v1115 = vpop.f32.mrf.mxu0
        %v1116 = vadd.f32 %v921, %v1115
        %v1117 = vpop.f32.mrf.mxu0
        %1118 = vmatprep.mubr.f32.mxu0 0.0
        %1119 = vmatmul.mubr.f32.gmra.mxu0 %v1023
        %v1120 = vpop.f32.mrf.mxu0
        %v1121 = vadd.f32 %v926, %v1120
        %v1122 = vpop.f32.mrf.mxu0
        %1123 = vmatprep.mubr.f32.mxu0 0.0
        %1124 = vmatmul.mubr.f32.gmra.mxu0 %v1025
        %v1125 = vpop.f32.mrf.mxu0
        %v1126 = vadd.f32 %v931, %v1125
        %v1127 = vpop.f32.mrf.mxu0
        %1128 = vmatprep.mubr.f32.mxu0 0.0
        %1129 = vmatmul.mubr.f32.gmra.mxu0 %v1027
        %v1130 = vpop.f32.mrf.mxu0
        %v1131 = vadd.f32 %v936, %v1130
        %v1132 = vpop.f32.mrf.mxu0
        %1133 = vmatprep.mubr.f32.mxu0 0.0
        %1134 = vmatmul.mubr.f32.gmra.mxu0 %v1029
        %v1135 = vpop.f32.mrf.mxu0
        %v1136 = vadd.f32 %v941, %v1135
        %v1137 = vpop.f32.mrf.mxu0
        %1138 = vmatprep.mubr.f32.mxu0 0.0
        %1139 = vmatmul.mubr.f32.gmra.mxu0 %v1031
        %v1140 = vpop.f32.mrf.mxu0
        %v1141 = vadd.f32 %v946, %v1140
        %v1142 = vpop.f32.mrf.mxu0
        %1143 = vmatprep.mubr.f32.mxu0 0.0
        %1144 = vmatmul.mubr.f32.gmra.mxu0 %v1033
        %v1145 = vpop.f32.mrf.mxu0
        %v1146 = vadd.f32 %v951, %v1145
        %v1147 = vpop.f32.mrf.mxu0
        %1148 = vmatprep.mubr.f32.mxu0 0.0
        %1149 = vmatmul.mubr.f32.gmra.mxu0 %v1035
        %v1150 = vpop.f32.mrf.mxu0
        %v1151 = vadd.f32 %v956, %v1150
        %v1152 = vpop.f32.mrf.mxu0
        %1153 = vmatprep.mubr.f32.mxu0 0.0
        %1154 = vmatmul.mubr.f32.gmra.mxu0 %v1037
        %v1155 = vpop.f32.mrf.mxu0
        %v1156 = vadd.f32 %v961, %v1155
        %v1157 = vpop.f32.mrf.mxu0
        %1158 = vmatprep.mubr.f32.mxu0 0.0
        %1159 = vmatmul.mubr.f32.gmra.mxu0 %v1039
        %v1160 = vpop.f32.mrf.mxu0
        %v1161 = vadd.f32 %v966, %v1160
        %v1162 = vpop.f32.mrf.mxu0
        %1163 = vmatprep.mubr.f32.mxu0 0.0
        %1164 = vmatmul.mubr.f32.gmra.mxu0 %v1041
        %v1165 = vpop.f32.mrf.mxu0
        %v1166 = vadd.f32 %v971, %v1165
        %v1167 = vpop.f32.mrf.mxu0
        %1168 = vmatprep.mubr.f32.mxu0 0.0
        %1169 = vmatmul.mubr.f32.gmra.mxu0 %v1043
        %v1170 = vpop.f32.mrf.mxu0
        %v1171 = vadd.f32 %v976, %v1170
        %v1172 = vpop.f32.mrf.mxu0
        %1173 = vmatprep.mubr.f32.mxu0 0.0
        %1174 = vmatmul.mubr.f32.gmra.mxu0 %v1045
        %v1175 = vpop.f32.mrf.mxu0
        %v1176 = vadd.f32 %v981, %v1175
        %v1177 = vpop.f32.mrf.mxu0
        %1178 = vmatprep.mubr.f32.mxu0 0.0
        %1179 = vmatmul.mubr.f32.gmra.mxu0 %v1047
        %v1180 = vpop.f32.mrf.mxu0
        %v1181 = vadd.f32 %v986, %v1180
        %v1182 = vpop.f32.mrf.mxu0
        %1183 = vdwg.mxu0
        %v1184 = vand.u32 %v267, 15
        %vm1185 = vcmp.eq.s32.totalorder %v288, %v1184
        %vm1186 = vcmp.eq.s32.totalorder %v289, %v1184
        %vm1187 = vcmp.eq.s32.totalorder %v290, %v1184
        %vm1188 = vcmp.eq.s32.totalorder %v291, %v1184
        %vm1189 = vcmp.eq.s32.totalorder %v292, %v1184
        %vm1190 = vcmp.eq.s32.totalorder %v293, %v1184
        %vm1191 = vcmp.eq.s32.totalorder %v294, %v1184
        %vm1192 = vcmp.eq.s32.totalorder %v295, %v1184
        %vm1193 = vcmp.eq.s32.totalorder %v296, %v1184
        %vm1194 = vcmp.eq.s32.totalorder %v297, %v1184
        %vm1195 = vcmp.eq.s32.totalorder %v298, %v1184
        %vm1196 = vcmp.eq.s32.totalorder %v299, %v1184
        %vm1197 = vcmp.eq.s32.totalorder %v300, %v1184
        %vm1198 = vcmp.eq.s32.totalorder %v301, %v1184
        %v1199 = vsel %vm1185, %v1116, 0.0
        %v1200 = vsel %vm1186, %v1121, 0.0
        %v1201 = vsel %vm1187, %v1126, 0.0
        %v1202 = vsel %vm1188, %v1131, 0.0
        %v1203 = vsel %vm1189, %v1136, 0.0
        %v1204 = vsel %vm1190, %v1141, 0.0
        %v1205 = vsel %vm1191, %v1146, 0.0
        %v1206 = vsel %vm1192, %v1151, 0.0
        %v1207 = vsel %vm1193, %v1156, 0.0
        %v1208 = vsel %vm1194, %v1161, 0.0
        %v1209 = vsel %vm1195, %v1166, 0.0
        %v1210 = vsel %vm1196, %v1171, 0.0
        %v1211 = vsel %vm1197, %v1176, 0.0
        %v1212 = vsel %vm1198, %v1181, 0.0
        %v1213 = vshra.s32 %v267, 4
        %vm1214 = vcmp.eq.s32.totalorder %v272, %v1213
        %v1215 = vsel %vm1214, 1, 0
        %v1216 = vcvt.s32.f32 %v1215
        %vm1217 = vcmask 916480
        %v1219 = vsel %vm1217, %v1199, 0
        %v1222 = vsel %vm1217, %v1200, 0
        %v1225 = vsel %vm1217, %v1201, 0
        %v1228 = vsel %vm1217, %v1202, 0
        %v1231 = vsel %vm1217, %v1203, 0
        %v1234 = vsel %vm1217, %v1204, 0
        %v1237 = vsel %vm1217, %v1205, 0
        %v1240 = vsel %vm1217, %v1206, 0
        %v1243 = vsel %vm1217, %v1207, 0
        %v1246 = vsel %vm1217, %v1208, 0
        %v1249 = vsel %vm1217, %v1209, 0
        %v1252 = vsel %vm1217, %v1210, 0
        %v1255 = vsel %vm1217, %v1211, 0
        %v1258 = vsel %vm1217, %v1212, 0
        %v1261 = vsel %vm1217, %v1216, 0
        %1263 = vmatprep.subr.mxu0 0.0
        %1264 = vmatpush1.xpose.msra.mxu0 0.0
        %1265 = vmatprep.subr.mxu0 0.0
        %1266 = vmatpush1.xpose.msra.mxu0 0.0
        %1267 = vmatprep.subr.mxu0 0.0
        %1268 = vmatpush1.xpose.msra.mxu0 0.0
        %1269 = vmatprep.subr.mxu0 0.0
        %1270 = vmatpush1.xpose.msra.mxu0 0.0
        %1271 = vmatprep.subr.mxu0 0.0
        %1272 = vmatpush1.xpose.msra.mxu0 0.0
        %1273 = vmatprep.subr.mxu0 0.0
        %1274 = vmatpush1.xpose.msra.mxu0 0.0
        %1275 = vmatprep.subr.mxu0 0.0
        %1276 = vmatpush1.xpose.msra.mxu0 0.0
        %1277 = vmatprep.subr.mxu0 0.0
        %1278 = vmatpush1.xpose.msra.mxu0 0.0
        %1279 = vmatprep.subr.mxu0 0.0
        %1280 = vmatpush1.xpose.msra.mxu0 0.0
        %1281 = vmatprep.subr.mxu0 0.0
        %1282 = vmatpush1.xpose.msra.mxu0 0.0
        %1283 = vmatprep.subr.mxu0 0.0
        %1284 = vmatpush1.xpose.msra.mxu0 0.0
        %1285 = vmatprep.subr.mxu0 0.0
        %1286 = vmatpush1.xpose.msra.mxu0 0.0
        %1287 = vmatprep.subr.mxu0 0.0
        %1288 = vmatpush1.xpose.msra.mxu0 0.0
        %1289 = vmatprep.subr.mxu0 0.0
        %1290 = vmatpush1.xpose.msra.mxu0 0.0
        %1291 = vmatprep.subr.mxu0 0.0
        %1292 = vmatpush1.xpose.msra.mxu0 0.0
        %1293 = vmatprep.subr.mxu0 0.0
        %1294 = vmatpush1.xpose.msra.mxu0 %v1261
        %1295 = vmatprep.subr.mxu0 0.0
        %1296 = vmatpush2.xpose.msra.mxu0 0.0
        %1297 = vmatprep.subr.mxu0 0.0
        %1298 = vmatpush2.xpose.msra.mxu0 0.0
        %1299 = vmatprep.subr.mxu0 0.0
        %1300 = vmatpush2.xpose.msra.mxu0 0.0
        %1301 = vmatprep.subr.mxu0 0.0
        %1302 = vmatpush2.xpose.msra.mxu0 0.0
        %1303 = vmatprep.subr.mxu0 0.0
        %1304 = vmatpush2.xpose.msra.mxu0 0.0
        %1305 = vmatprep.subr.mxu0 0.0
        %1306 = vmatpush2.xpose.msra.mxu0 0.0
        %1307 = vmatprep.subr.mxu0 0.0
        %1308 = vmatpush2.xpose.msra.mxu0 0.0
        %1309 = vmatprep.subr.mxu0 0.0
        %1310 = vmatpush2.xpose.msra.mxu0 0.0
        %1311 = vmatprep.subr.mxu0 0.0
        %1312 = vmatpush2.xpose.msra.mxu0 0.0
        %1313 = vmatprep.subr.mxu0 0.0
        %1314 = vmatpush2.xpose.msra.mxu0 0.0
        %1315 = vmatprep.subr.mxu0 0.0
        %1316 = vmatpush2.xpose.msra.mxu0 0.0
        %1317 = vmatprep.subr.mxu0 0.0
        %1318 = vmatpush2.xpose.msra.mxu0 0.0
        %1319 = vmatprep.subr.mxu0 0.0
        %1320 = vmatpush2.xpose.msra.mxu0 0.0
        %1321 = vmatprep.subr.mxu0 0.0
        %1322 = vmatpush2.xpose.msra.mxu0 0.0
        %1323 = vmatprep.subr.mxu0 0.0
        %1324 = vmatpush2.xpose.msra.mxu0 0.0
        %1325 = vmatprep.subr.mxu0 0.0
        %1326 = vmatpush2.xpose.msra.mxu0 0.0
        %1327 = vmatprep.mubr.f32.mxu0 0.0
        %1328 = vmatmul.mubr.f32.gmra.mxu0 %v1219
        %v1329 = vpop.f32.mrf.mxu0
        %v1330 = vadd.f32 0.0, %v1329
        %v1331 = vpop.f32.mrf.mxu0
        %1332 = vmatprep.mubr.f32.mxu0 0.0
        %1333 = vmatmul.mubr.f32.gmra.mxu0 %v1222
        %v1334 = vpop.f32.mrf.mxu0
        %v1335 = vadd.f32 0.0, %v1334
        %v1336 = vpop.f32.mrf.mxu0
        %1337 = vmatprep.mubr.f32.mxu0 0.0
        %1338 = vmatmul.mubr.f32.gmra.mxu0 %v1225
        %v1339 = vpop.f32.mrf.mxu0
        %v1340 = vadd.f32 0.0, %v1339
        %v1341 = vpop.f32.mrf.mxu0
        %1342 = vmatprep.mubr.f32.mxu0 0.0
        %1343 = vmatmul.mubr.f32.gmra.mxu0 %v1228
        %v1344 = vpop.f32.mrf.mxu0
        %v1345 = vadd.f32 0.0, %v1344
        %v1346 = vpop.f32.mrf.mxu0
        %1347 = vmatprep.mubr.f32.mxu0 0.0
        %1348 = vmatmul.mubr.f32.gmra.mxu0 %v1231
        %v1349 = vpop.f32.mrf.mxu0
        %v1350 = vadd.f32 0.0, %v1349
        %v1351 = vpop.f32.mrf.mxu0
        %1352 = vmatprep.mubr.f32.mxu0 0.0
        %1353 = vmatmul.mubr.f32.gmra.mxu0 %v1234
        %v1354 = vpop.f32.mrf.mxu0
        %v1355 = vadd.f32 0.0, %v1354
        %v1356 = vpop.f32.mrf.mxu0
        %1357 = vmatprep.mubr.f32.mxu0 0.0
        %1358 = vmatmul.mubr.f32.gmra.mxu0 %v1237
        %v1359 = vpop.f32.mrf.mxu0
        %v1360 = vadd.f32 0.0, %v1359
        %v1361 = vpop.f32.mrf.mxu0
        %1362 = vmatprep.mubr.f32.mxu0 0.0
        %1363 = vmatmul.mubr.f32.gmra.mxu0 %v1240
        %v1364 = vpop.f32.mrf.mxu0
        %v1365 = vadd.f32 0.0, %v1364
        %v1366 = vpop.f32.mrf.mxu0
        %1367 = vmatprep.mubr.f32.mxu0 0.0
        %1368 = vmatmul.mubr.f32.gmra.mxu0 %v1243
        %v1369 = vpop.f32.mrf.mxu0
        %v1370 = vadd.f32 0.0, %v1369
        %v1371 = vpop.f32.mrf.mxu0
        %1372 = vmatprep.mubr.f32.mxu0 0.0
        %1373 = vmatmul.mubr.f32.gmra.mxu0 %v1246
        %v1374 = vpop.f32.mrf.mxu0
        %v1375 = vadd.f32 0.0, %v1374
        %v1376 = vpop.f32.mrf.mxu0
        %1377 = vmatprep.mubr.f32.mxu0 0.0
        %1378 = vmatmul.mubr.f32.gmra.mxu0 %v1249
        %v1379 = vpop.f32.mrf.mxu0
        %v1380 = vadd.f32 0.0, %v1379
        %v1381 = vpop.f32.mrf.mxu0
        %1382 = vmatprep.mubr.f32.mxu0 0.0
        %1383 = vmatmul.mubr.f32.gmra.mxu0 %v1252
        %v1384 = vpop.f32.mrf.mxu0
        %v1385 = vadd.f32 0.0, %v1384
        %v1386 = vpop.f32.mrf.mxu0
        %1387 = vmatprep.mubr.f32.mxu0 0.0
        %1388 = vmatmul.mubr.f32.gmra.mxu0 %v1255
        %v1389 = vpop.f32.mrf.mxu0
        %v1390 = vadd.f32 0.0, %v1389
        %v1391 = vpop.f32.mrf.mxu0
        %1392 = vmatprep.mubr.f32.mxu0 0.0
        %1393 = vmatmul.mubr.f32.gmra.mxu0 %v1258
        %v1394 = vpop.f32.mrf.mxu0
        %v1395 = vadd.f32 0.0, %v1394
        %v1396 = vpop.f32.mrf.mxu0
        %1397 = vdwg.mxu0
        %1398 = vmatprep.subr.mxu0 0.0
        %1399 = vmatpush1.msra.mxu0 0.0
        %1400 = vmatprep.subr.mxu0 0.0
        %1401 = vmatpush1.msra.mxu0 0.0
        %1402 = vmatprep.subr.mxu0 0.0
        %1403 = vmatpush1.msra.mxu0 %v1395
        %1404 = vmatprep.subr.mxu0 0.0
        %1405 = vmatpush1.msra.mxu0 %v1390
        %1406 = vmatprep.subr.mxu0 0.0
        %1407 = vmatpush1.msra.mxu0 %v1385
        %1408 = vmatprep.subr.mxu0 0.0
        %1409 = vmatpush1.msra.mxu0 %v1380
        %1410 = vmatprep.subr.mxu0 0.0
        %1411 = vmatpush1.msra.mxu0 %v1375
        %1412 = vmatprep.subr.mxu0 0.0
        %1413 = vmatpush1.msra.mxu0 %v1370
        %1414 = vmatprep.subr.mxu0 0.0
        %1415 = vmatpush1.msra.mxu0 %v1365
        %1416 = vmatprep.subr.mxu0 0.0
        %1417 = vmatpush1.msra.mxu0 %v1360
        %1418 = vmatprep.subr.mxu0 0.0
        %1419 = vmatpush1.msra.mxu0 %v1355
        %1420 = vmatprep.subr.mxu0 0.0
        %1421 = vmatpush1.msra.mxu0 %v1350
        %1422 = vmatprep.subr.mxu0 0.0
        %1423 = vmatpush1.msra.mxu0 %v1345
        %1424 = vmatprep.subr.mxu0 0.0
        %1425 = vmatpush1.msra.mxu0 %v1340
        %1426 = vmatprep.subr.mxu0 0.0
        %1427 = vmatpush1.msra.mxu0 %v1335
        %1428 = vmatprep.subr.mxu0 0.0
        %1429 = vmatpush1.msra.mxu0 %v1330
        %1430 = vmatprep.subr.mxu0 0.0
        %1431 = vmatpush2.msra.mxu0 0.0
        %1432 = vmatprep.subr.mxu0 0.0
        %1433 = vmatpush2.msra.mxu0 0.0
        %1434 = vmatprep.subr.mxu0 0.0
        %1435 = vmatpush2.msra.mxu0 0.0
        %1436 = vmatprep.subr.mxu0 0.0
        %1437 = vmatpush2.msra.mxu0 0.0
        %1438 = vmatprep.subr.mxu0 0.0
        %1439 = vmatpush2.msra.mxu0 0.0
        %1440 = vmatprep.subr.mxu0 0.0
        %1441 = vmatpush2.msra.mxu0 0.0
        %1442 = vmatprep.subr.mxu0 0.0
        %1443 = vmatpush2.msra.mxu0 0.0
        %1444 = vmatprep.subr.mxu0 0.0
        %1445 = vmatpush2.msra.mxu0 0.0
        %1446 = vmatprep.subr.mxu0 0.0
        %1447 = vmatpush2.msra.mxu0 0.0
        %1448 = vmatprep.subr.mxu0 0.0
        %1449 = vmatpush2.msra.mxu0 0.0
        %1450 = vmatprep.subr.mxu0 0.0
        %1451 = vmatpush2.msra.mxu0 0.0
        %1452 = vmatprep.subr.mxu0 0.0
        %1453 = vmatpush2.msra.mxu0 0.0
        %1454 = vmatprep.subr.mxu0 0.0
        %1455 = vmatpush2.msra.mxu0 0.0
        %1456 = vmatprep.subr.mxu0 0.0
        %1457 = vmatpush2.msra.mxu0 0.0
        %1458 = vmatprep.subr.mxu0 0.0
        %1459 = vmatpush2.msra.mxu0 0.0
        %1460 = vmatprep.subr.mxu0 0.0
        %1461 = vmatpush2.msra.mxu0 0.0
        %1462 = vmatprep.mubr.f32.mxu0 0.0
        %1463 = vmatmul.mubr.f32.gmra.mxu0 %v1261
        %v1464 = vpop.f32.mrf.mxu0
        %v1465 = vadd.f32 0.0, %v1464
        %v1466 = vpop.f32.mrf.mxu0
        %1467 = vdwg.mxu0
        %vm1468 = vcmask 55296
        %1469 = vst.msk [vmem:[%s265] sm:$0x7f] %vm1468, %v1465
        %p1470 = scmp.lt.s32.totalorder %s20, 1
        %s1471 = scalar_select %p1470, %s20, 1
        %s1472 = smul.addr %s1471, 8
        %s1473 = scalar_lea.vmem %s3, %s1472
        // Predicated region
        $region45: #{tpu_custom_call.1} parent=31 // pred_check
          %p1474 = pneg %p116
        $region46: #{tpu_custom_call.1} parent=31 // pred_check_branch
          %1476 = sbr.rel (%p1474) target = $region48
        $region47: #{tpu_custom_call.1} parent=31 // pred_region
          _
        $region48: #{tpu_custom_call.1} parent=31 // pred_fallthru
          _
      $region32: #{tpu_custom_call.1} parent=5 // pred_fallthru
        _
      %p1477 = scmp.le.s32.totalorder 2, %s15
      // Predicated region
      $region49: #{tpu_custom_call.1} parent=5 // pred_check
        %p1478 = pneg %p1477
      $region50: #{tpu_custom_call.1} parent=5 // pred_check_branch
        %1480 = sbr.rel (%p1478) target = $region52
      $region51: #{tpu_custom_call.1} parent=5 // pred_region
        %s1481 = ssub.s32 %s15, 2
        // Predicated region
        $region53: #{tpu_custom_call.1} parent=51 // pred_check
          %p1482 = pneg %p122
        $region54: #{tpu_custom_call.1} parent=51 // pred_check_branch
          %1484 = sbr.rel (%p1482) target = $region56
        $region55: #{tpu_custom_call.1} parent=51 // pred_region
          %p1485 = scmp.lt.s32.totalorder %s21, 1
          %s1486 = scalar_select %p1485, %s21, 1
          %s1487 = smul.addr %s1486, 8
          %s1488 = scalar_lea.vmem %s3, %s1487
        $region56: #{tpu_custom_call.1} parent=51 // pred_fallthru
          _
      $region52: #{tpu_custom_call.1} parent=5 // pred_fallthru
        _
    $region6: #{tpu_custom_call.1} parent=1 // loop_footer
      %s19 = sadd.s32 1, %s15
    $region7: #{tpu_custom_call.1} parent=1 // loop_footer_branch
      %14 = sbr.rel target = $region3
    $region8: #{tpu_custom_call.1} parent=1 // loop_exit
      _
    %1489 = vsyncpa [#allocation3], 1
    %s1490 = scalar_lea.sflag [#allocation3], 1
    %1491 = vsyncpa %s1490, 1
    %1492 = vsyncpa [#allocation5], 1
    %s1493 = scalar_lea.sflag [#allocation5], 1
    %1494 = vsyncpa %s1493, 1

</llo_original>
